<compile_context>
chip_gen: v5e
topology: v5e:2x2
jax: 0.10.0
libtpu: 0.0.40
codegen_flags: <defaults>
</compile_context>

<pallas_src>
import jax
import jax.numpy as jnp
import numpy as np
from jax import lax
from jax.experimental import pallas as pl
from jax.experimental.pallas import tpu as pltpu

# ----- model hyperparameters (small, consistent with the module) -----
KS = 4                     # kernel_size
N_COLORS = 2               # n_colors (image channels)
D = KS * KS                # D = kernel_size**2
CD = N_COLORS * D          # flattened pixel dim (L*D in the torch code)
J = 8                      # neurons (must be even)
B = 2                      # batch
INPUT_NOISE = 0.4
OUTPUT_NOISE = 0.6
NONLINEARITY = "relu"      # in {"relu", "softplus"}

# packed output slab: (8, 128) f32, one full vreg, one dense DMA
SLAB_ROWS = 8
SLAB_LANES = 128
# lane layout inside the slab (derived again inside the kernel from ref shapes):
#   [0,              2B*J)        : C matrices side by side, matrix m at lanes [m*J, (m+1)*J)
#   [2B*J,           2B*J +  J)   : z   (rows 0..B-1)
#   [2B*J + J,       2B*J + 2J)   : r   (rows 0..B-1)
#   [2B*J + 2J,      2B*J + 2J+2B): log-dets (row 0): first B numerator, next B denominator


def _batched_chol_logdet2(A):
    """log2(det(A_m)) for a stack of SPD matrices A: (NM, n, n), all matrices in lockstep.

    Fully Python-unrolled right-looking Cholesky recurrence with a STATIC pivot index:
    column/row/pivot extraction is static slicing, the strict-lower masks are iota-vs-constant
    compares, the pivot rsqrt and log2 run on the EUP, and the rank-1 trailing update is a VPU
    broadcast -- no MXU or XLU reductions on the serial critical path.
    Equals 2 * sum(log2(diag(cholesky(A_m)))) as in RetinaVAE.forward.
    (Unpivoted: positive pivots are guaranteed here because C_nr = sigma_out^2 * I is added.)
    """
    nm, n, _ = A.shape
    rowc = lax.broadcasted_iota(jnp.int32, (nm, n, 1), 1)   # sublane index, column form
    colr = lax.broadcasted_iota(jnp.int32, (nm, 1, n), 2)   # lane index, row form

    A_cur = A
    acc = jnp.zeros((nm, 1, 1), jnp.float32)
    for k in range(n):                                      # n = 8, static unroll
        colk = A_cur[:, :, k:k + 1]                         # (nm, n, 1) column k
        rowk = A_cur[:, k:k + 1, :]                         # (nm, 1, n) row k (A symmetric)
        dkk = A_cur[:, k:k + 1, k:k + 1]                    # (nm, 1, 1) pivot
        inv_sq = lax.rsqrt(dkk)                             # EUP
        vc = jnp.where(rowc > k, colk, 0.0) * inv_sq        # strict-lower column
        vr = jnp.where(colr > k, rowk, 0.0) * inv_sq        # strict-right row
        A_cur = A_cur - vc * vr                             # rank-1 trailing update (VPU)
        acc = acc + jnp.log2(dkk)                           # EUP
    return acc                                              # (nm, 1, 1)


def _retina_kernel(xn_ref, sm_ref, w_ref, cov_ref, slab_ref):
    bsz = xn_ref.shape[0] // 2        # [image ; input noise] stacked along rows
    jn = w_ref.shape[1]

    W = w_ref[...]                                        # (CD, J)
    loga = sm_ref[0:1, :]                                 # (1, J)
    logb = sm_ref[1:2, :]                                 # (1, J)
    nr = sm_ref[2:2 + bsz, :]                             # (B, J) output noise
    gain = jnp.exp(loga)
    bias = jnp.exp(logb)

    # ---- encoder: one (B, CD) @ (CD, J) matmul for the whole batch ----
    x = xn_ref[0:bsz, :] + xn_ref[bsz:2 * bsz, :]         # image + input noise, (B, CD)
    y = jnp.dot(x, W, preferred_element_type=jnp.float32) # (B, J)
    ymb = y - bias
    z = gain * ymb + nr
    if NONLINEARITY == "relu":
        r = gain * jnp.maximum(ymb, 0.0)
        grad = (ymb > 0.0).astype(jnp.float32)
    else:  # softplus with beta=2.5 (F.softplus(x, beta=2.5))
        r = gain * (jax.nn.softplus(2.5 * ymb) / 2.5)
        grad = jax.nn.sigmoid(2.5 * ymb)
    geff = gain * grad                                    # effective gain (B, J)

    # ---- batch-independent W^T C W matrices, exploiting C_nx = sigma_in^2 * I ----
    wtw = lax.dot_general(W, W, (((0,), (0,)), ((), ())),
                          preferred_element_type=jnp.float32)          # W^T W, (J, J)
    m_nx = (INPUT_NOISE ** 2) * wtw                                    # W^T C_nx W
    covw = jnp.dot(cov_ref[...], W, preferred_element_type=jnp.float32)
    m_z = lax.dot_general(W, covw, (((0,), (0,)), ((), ())),
                          preferred_element_type=jnp.float32) + m_nx   # W^T (cov + C_nx) W

    eye_j = (lax.broadcasted_iota(jnp.int32, (jn, jn), 0)
             == lax.broadcasted_iota(jnp.int32, (jn, jn), 1)).astype(jnp.float32)
    c_nr = (OUTPUT_NOISE ** 2) * eye_j

    # ---- per-row C = outer(g, g) * M + C_nr, built as VALUES (no ref writes / read-back).
    # The outer product is computed once per batch row and reused for C_z and C_zx.
    # (For large, tiled batches this would become a single (B,J)->(B,J,1) relayout + one
    #  broadcast multiply; at B=2 the per-row form keeps the lowering trivially simple.)
    outers = []
    for b in range(bsz):
        g_row = geff[b:b + 1, :]                                       # (1, J)
        g_col = jnp.sum(eye_j * g_row, axis=1, keepdims=True)          # (J, 1)
        outers.append(g_col * g_row)                                   # (J, J)
    mats = [o * m_z + c_nr for o in outers] + [o * m_nx + c_nr for o in outers]
    c_all = jnp.stack(mats, axis=0)                                    # (2B, J, J)

    # ---- one batched Cholesky log2-det over all 2B stacked matrices (in registers) ----
    ld = _batched_chol_logdet2(c_all)                                  # (2B, 1, 1)

    # ---- pack everything into the single lane-dense (8, 128) slab ----
    z_off = 2 * bsz * jn
    r_off = z_off + jn
    ld_off = r_off + jn

    slab_ref[...] = jnp.zeros_like(slab_ref)                           # one full-tile init
    for m in range(2 * bsz):                                           # C matrices, lanes [mJ,(m+1)J)
        slab_ref[:, m * jn:(m + 1) * jn] = mats[m]
    slab_ref[0:bsz, z_off:z_off + jn] = z
    slab_ref[0:bsz, r_off:r_off + jn] = r

    # place the 2B log-dets on row 0 at lanes [ld_off, ld_off + 2B)
    lane = lax.broadcasted_iota(jnp.int32, (1, 2 * bsz), 1)
    ld_row = jnp.zeros((1, 2 * bsz), jnp.float32)
    for m in range(2 * bsz):
        ld_row = ld_row + jnp.where(lane == m, ld[m], 0.0)
    slab_ref[0:1, ld_off:ld_off + 2 * bsz] = ld_row


def retina_vae_forward(x, params, noise_key):
    bsz = x.shape[0]
    img = x.reshape(bsz, CD).astype(jnp.float32)           # matches x.view(B,-1,D).flatten(1,2)
    k1, k2 = jax.random.split(noise_key)
    nx = (INPUT_NOISE * jax.random.normal(k1, (bsz, CD))).astype(jnp.float32)
    nr = (OUTPUT_NOISE * jax.random.normal(k2, (bsz, J))).astype(jnp.float32)

    W = params["W"].astype(jnp.float32)
    cov = params["data_covariance"].astype(jnp.float32)
    logA = params["logA"].reshape(1, J).astype(jnp.float32)
    logB = params["logB"].reshape(1, J).astype(jnp.float32)

    # coalesced inputs: 4 DMAs instead of 7
    xn = jnp.concatenate([img, nx], axis=0)                # (2B, CD)  [image ; input noise]
    small = jnp.concatenate([logA, logB, nr], axis=0)      # (2+B, J)  [logA ; logB ; output noise]

    slab = pl.pallas_call(
        _retina_kernel,
        out_shape=jax.ShapeDtypeStruct((SLAB_ROWS, SLAB_LANES), jnp.float32),
        grid=(1,),   # whole batch in one step; tile the batch (128/256 rows) for large B
        in_specs=[
            pl.BlockSpec((2 * bsz, CD), lambda i: (0, 0)),       # [image ; input noise]
            pl.BlockSpec((2 + bsz, J), lambda i: (0, 0)),        # [logA ; logB ; output noise]
            pl.BlockSpec((CD, J), lambda i: (0, 0)),             # W
            pl.BlockSpec((CD, CD), lambda i: (0, 0)),            # data_covariance
        ],
        out_specs=pl.BlockSpec((SLAB_ROWS, SLAB_LANES), lambda i: (0, 0)),
        compiler_params=pltpu.CompilerParams(dimension_semantics=("parallel",)),
    )(xn, small, W, cov)

    # ---- unpack the slab in the wrapper ----
    z_off = 2 * bsz * J
    r_off = z_off + J
    ld_off = r_off + J
    c_flat = slab[:J, :2 * bsz * J]                                  # (J, 2B*J)
    c_all = c_flat.reshape(J, 2 * bsz, J).transpose(1, 0, 2)         # (2B, J, J)
    ld_row = slab[0, ld_off:ld_off + 2 * bsz]

    out = {
        "z": slab[:bsz, z_off:z_off + J],
        "r": slab[:bsz, r_off:r_off + J],
        "C_z": c_all[:bsz],
        "C_zx": c_all[bsz:],
        "logdet_numerator": ld_row[:bsz],
        "logdet_denominator": ld_row[bsz:],
    }
    return out, (nx, nr)


def init_params(key):
    kW, kA, kB, kC, kL = jax.random.split(key, 5)
    W = 0.02 * jax.random.normal(kW, (CD, J), jnp.float32)
    W = W / jnp.linalg.norm(W, axis=0, keepdims=True)                 # Encoder.__init__ normalization
    logA = 0.02 * jax.random.normal(kA, (J,), jnp.float32)
    logB = 0.02 * jax.random.normal(kB, (J,), jnp.float32) - 1.0
    A = jax.random.normal(kC, (CD, CD), jnp.float32)
    data_cov = A @ A.T / CD + 0.5 * jnp.eye(CD, dtype=jnp.float32)    # PSD data covariance buffer
    Lambda = jax.random.uniform(kL, (J,), jnp.float32)                # not used in forward
    return {"W": W, "logA": logA, "logB": logB, "data_covariance": data_cov, "Lambda": Lambda}


def reference_forward(x, nx, nr, params):
    """Pure-JAX reference mirroring the PyTorch forward (same noise tensors)."""
    bsz = x.shape[0]
    img = x.reshape(bsz, CD)
    W = params["W"]
    cov = params["data_covariance"]
    gain = jnp.exp(params["logA"])
    bias = jnp.exp(params["logB"])
    y = (img + nx) @ W
    ymb = y - bias
    z = gain * ymb + nr
    if NONLINEARITY == "relu":
        r = gain * jnp.maximum(ymb, 0.0)
        grad = (ymb > 0).astype(jnp.float32)
    else:
        r = gain * (jax.nn.softplus(2.5 * ymb) / 2.5)
        grad = jax.nn.sigmoid(2.5 * ymb)
    geff = gain * grad
    c_nx = INPUT_NOISE ** 2 * jnp.eye(CD)
    c_nr = OUTPUT_NOISE ** 2 * jnp.eye(J)

    def mst(A, G):
        M = (A @ W).T @ W
        return G[:, :, None] * M[None] * G[:, None, :]

    C_zx = mst(c_nx, geff) + c_nr
    C_z = mst(cov + c_nx, geff) + c_nr

    def logdet2(M):
        L = jnp.linalg.cholesky(M)
        return 2.0 * jnp.sum(jnp.log2(jnp.diagonal(L, axis1=-2, axis2=-1)), axis=-1)

    return z, r, C_z, C_zx, logdet2(C_z), logdet2(C_zx)


if __name__ == "__main__":
    key = jax.random.PRNGKey(0)
    pkey, xkey, nkey = jax.random.split(key, 3)
    params = init_params(pkey)
    x = jax.random.normal(xkey, (B, N_COLORS, KS, KS), jnp.float32)   # NCHW input

    out, (nx, nr) = retina_vae_forward(x, params, nkey)
    jax.block_until_ready(out)

    z_r, r_r, cz_r, czx_r, ldn_r, ldd_r = reference_forward(x, nx, nr, params)
    np.testing.assert_allclose(np.asarray(out["z"]), np.asarray(z_r), rtol=1e-3, atol=1e-3)
    np.testing.assert_allclose(np.asarray(out["r"]), np.asarray(r_r), rtol=1e-3, atol=1e-3)
    np.testing.assert_allclose(np.asarray(out["C_z"]), np.asarray(cz_r), rtol=1e-3, atol=1e-3)
    np.testing.assert_allclose(np.asarray(out["C_zx"]), np.asarray(czx_r), rtol=1e-3, atol=1e-3)
    np.testing.assert_allclose(np.asarray(out["logdet_numerator"]), np.asarray(ldn_r),
                               rtol=1e-3, atol=1e-3)
    np.testing.assert_allclose(np.asarray(out["logdet_denominator"]), np.asarray(ldd_r),
                               rtol=1e-3, atol=1e-3)
    print("KERNEL_OK")
</pallas_src>

<mosaic_0001>
module attributes {stable_mosaic.version = 11 : i64} {
  func.func @_retina_kernel(%arg0: i32, %arg1: memref<4x32xf32, #tpu.memory_space<vmem>>, %arg2: memref<4x8xf32, #tpu.memory_space<vmem>>, %arg3: memref<32x8xf32, #tpu.memory_space<vmem>>, %arg4: memref<32x32xf32, #tpu.memory_space<vmem>>, %arg5: memref<8x128xf32, #tpu.memory_space<vmem>>) attributes {dimension_semantics = [#tpu.dimension_semantics<parallel>], iteration_bounds = array<i64: 1>, scalar_prefetch = 0 : i64, scratch_operands = 0 : i64, tpu.core_type = #tpu.core_type<tc>, window_params = [{pipeline_mode = #tpu.pipeline_mode<synchronous>, transform_indices = @transform_0, window_bounds = array<i64: 4, 32>}, {pipeline_mode = #tpu.pipeline_mode<synchronous>, transform_indices = @transform_1, window_bounds = array<i64: 4, 8>}, {pipeline_mode = #tpu.pipeline_mode<synchronous>, transform_indices = @transform_2, window_bounds = array<i64: 32, 8>}, {pipeline_mode = #tpu.pipeline_mode<synchronous>, transform_indices = @transform_3, window_bounds = array<i64: 32, 32>}, {pipeline_mode = #tpu.pipeline_mode<synchronous>, transform_indices = @transform_4, window_bounds = array<i64: 8, 128>}]} {
    %c0 = arith.constant 0 : index
    %c0_0 = arith.constant 0 : index
    %0 = vector.load %arg3[%c0, %c0_0] : memref<32x8xf32, #tpu.memory_space<vmem>>, vector<32x8xf32>
    %c0_1 = arith.constant 0 : index
    %c0_2 = arith.constant 0 : index
    %1 = vector.load %arg2[%c0_1, %c0_2] : memref<4x8xf32, #tpu.memory_space<vmem>>, vector<1x8xf32>
    %c1 = arith.constant 1 : index
    %c0_3 = arith.constant 0 : index
    %2 = vector.load %arg2[%c1, %c0_3] : memref<4x8xf32, #tpu.memory_space<vmem>>, vector<1x8xf32>
    %c2 = arith.constant 2 : index
    %c0_4 = arith.constant 0 : index
    %3 = vector.load %arg2[%c2, %c0_4] : memref<4x8xf32, #tpu.memory_space<vmem>>, vector<2x8xf32>
    %4 = math.exp %1 : vector<1x8xf32>
    %5 = math.exp %2 : vector<1x8xf32>
    %c0_5 = arith.constant 0 : index
    %c0_6 = arith.constant 0 : index
    %6 = vector.load %arg1[%c0_5, %c0_6] : memref<4x32xf32, #tpu.memory_space<vmem>>, vector<2x32xf32>
    %c2_7 = arith.constant 2 : index
    %c0_8 = arith.constant 0 : index
    %7 = vector.load %arg1[%c2_7, %c0_8] : memref<4x32xf32, #tpu.memory_space<vmem>>, vector<2x32xf32>
    %8 = arith.addf %6, %7 : vector<2x32xf32>
    %cst = arith.constant dense<0.000000e+00> : vector<2x8xf32>
    %9 = tpu.matmul %8, %0, %cst {dimension_numbers = #tpu.dot_dimension_numbers<[1], [0], [0], [1], [0, 0, 1, 1], [], []>} : vector<2x32xf32>, vector<32x8xf32>, vector<2x8xf32> -> vector<2x8xf32>
    %10 = vector.broadcast %5 : vector<1x8xf32> to vector<2x8xf32>
    %11 = arith.subf %9, %10 : vector<2x8xf32>
    %12 = vector.broadcast %4 : vector<1x8xf32> to vector<2x8xf32>
    %13 = arith.mulf %12, %11 : vector<2x8xf32>
    %14 = arith.addf %13, %3 : vector<2x8xf32>
    %cst_9 = arith.constant 0.000000e+00 : f32
    %15 = vector.broadcast %cst_9 : f32 to vector<2x8xf32>
    %16 = arith.maximumf %11, %15 : vector<2x8xf32>
    %17 = vector.broadcast %4 : vector<1x8xf32> to vector<2x8xf32>
    %18 = arith.mulf %17, %16 : vector<2x8xf32>
    %cst_10 = arith.constant 0.000000e+00 : f32
    %19 = vector.broadcast %cst_10 : f32 to vector<2x8xf32>
    %20 = arith.cmpf ogt, %11, %19 : vector<2x8xf32>
    %21 = arith.extui %20 : vector<2x8xi1> to vector<2x8xi32>
    %22 = arith.sitofp %21 : vector<2x8xi32> to vector<2x8xf32>
    %23 = vector.broadcast %4 : vector<1x8xf32> to vector<2x8xf32>
    %24 = arith.mulf %23, %22 : vector<2x8xf32>
    %cst_11 = arith.constant dense<0.000000e+00> : vector<8x8xf32>
    %25 = tpu.matmul %0, %0, %cst_11 {dimension_numbers = #tpu.dot_dimension_numbers<[0], [0], [1], [1], [0, 1, 1, 1], [], []>} : vector<32x8xf32>, vector<32x8xf32>, vector<8x8xf32> -> vector<8x8xf32>
    %cst_12 = arith.constant 1.600000e-01 : f32
    %26 = vector.broadcast %cst_12 : f32 to vector<8x8xf32>
    %27 = arith.mulf %26, %25 : vector<8x8xf32>
    %c0_13 = arith.constant 0 : index
    %c0_14 = arith.constant 0 : index
    %28 = vector.load %arg4[%c0_13, %c0_14] : memref<32x32xf32, #tpu.memory_space<vmem>>, vector<32x32xf32>
    %cst_15 = arith.constant dense<0.000000e+00> : vector<32x8xf32>
    %29 = tpu.matmul %28, %0, %cst_15 {dimension_numbers = #tpu.dot_dimension_numbers<[1], [0], [0], [1], [0, 0, 1, 1], [], []>} : vector<32x32xf32>, vector<32x8xf32>, vector<32x8xf32> -> vector<32x8xf32>
    %cst_16 = arith.constant dense<0.000000e+00> : vector<8x8xf32>
    %30 = tpu.matmul %0, %29, %cst_16 {dimension_numbers = #tpu.dot_dimension_numbers<[0], [0], [1], [1], [0, 1, 1, 1], [], []>} : vector<32x8xf32>, vector<32x8xf32>, vector<8x8xf32> -> vector<8x8xf32>
    %31 = arith.addf %30, %27 : vector<8x8xf32>
    %32 = tpu.iota {dimensions = array<i32: 0>} : vector<8x8xi32>
    %33 = tpu.iota {dimensions = array<i32: 1>} : vector<8x8xi32>
    %34 = arith.cmpi eq, %32, %33 : vector<8x8xi32>
    %35 = arith.extui %34 : vector<8x8xi1> to vector<8x8xi32>
    %36 = arith.sitofp %35 : vector<8x8xi32> to vector<8x8xf32>
    %cst_17 = arith.constant 3.600000e-01 : f32
    %37 = vector.broadcast %cst_17 : f32 to vector<8x8xf32>
    %38 = arith.mulf %37, %36 : vector<8x8xf32>
    %39 = vector.extract_strided_slice %24 {offsets = [0, 0], sizes = [1, 8], strides = [1, 1]} : vector<2x8xf32> to vector<1x8xf32>
    %40 = vector.broadcast %39 : vector<1x8xf32> to vector<8x8xf32>
    %41 = arith.mulf %36, %40 : vector<8x8xf32>
    %cst_18 = arith.constant dense<0.000000e+00> : vector<8xf32>
    %42 = vector.multi_reduction <add>, %41, %cst_18 [1] : vector<8x8xf32> to vector<8xf32>
    %43 = vector.shape_cast %42 : vector<8xf32> to vector<8x1xf32>
    %44 = vector.broadcast %43 : vector<8x1xf32> to vector<8x8xf32>
    %45 = vector.broadcast %39 : vector<1x8xf32> to vector<8x8xf32>
    %46 = arith.mulf %44, %45 : vector<8x8xf32>
    %47 = vector.extract_strided_slice %24 {offsets = [1, 0], sizes = [1, 8], strides = [1, 1]} : vector<2x8xf32> to vector<1x8xf32>
    %48 = vector.broadcast %47 : vector<1x8xf32> to vector<8x8xf32>
    %49 = arith.mulf %36, %48 : vector<8x8xf32>
    %cst_19 = arith.constant dense<0.000000e+00> : vector<8xf32>
    %50 = vector.multi_reduction <add>, %49, %cst_19 [1] : vector<8x8xf32> to vector<8xf32>
    %51 = vector.shape_cast %50 : vector<8xf32> to vector<8x1xf32>
    %52 = vector.broadcast %51 : vector<8x1xf32> to vector<8x8xf32>
    %53 = vector.broadcast %47 : vector<1x8xf32> to vector<8x8xf32>
    %54 = arith.mulf %52, %53 : vector<8x8xf32>
    %55 = arith.mulf %46, %31 : vector<8x8xf32>
    %56 = arith.addf %55, %38 : vector<8x8xf32>
    %57 = arith.mulf %54, %31 : vector<8x8xf32>
    %58 = arith.addf %57, %38 : vector<8x8xf32>
    %59 = arith.mulf %46, %27 : vector<8x8xf32>
    %60 = arith.addf %59, %38 : vector<8x8xf32>
    %61 = arith.mulf %54, %27 : vector<8x8xf32>
    %62 = arith.addf %61, %38 : vector<8x8xf32>
    %63 = vector.shape_cast %56 : vector<8x8xf32> to vector<1x8x8xf32>
    %64 = vector.shape_cast %58 : vector<8x8xf32> to vector<1x8x8xf32>
    %65 = vector.shape_cast %60 : vector<8x8xf32> to vector<1x8x8xf32>
    %66 = vector.shape_cast %62 : vector<8x8xf32> to vector<1x8x8xf32>
    %67 = tpu.concatenate %63, %64, %65, %66 in 0 : vector<1x8x8xf32>, vector<1x8x8xf32>, vector<1x8x8xf32>, vector<1x8x8xf32> -> vector<4x8x8xf32>
    %68 = tpu.iota {dimensions = array<i32: 1>} : vector<4x8x1xi32>
    %69 = tpu.iota {dimensions = array<i32: 2>} : vector<4x1x8xi32>
    %cst_20 = arith.constant 0.000000e+00 : f32
    %70 = vector.broadcast %cst_20 : f32 to vector<4x1x1xf32>
    %71 = vector.extract_strided_slice %67 {offsets = [0, 0, 0], sizes = [4, 8, 1], strides = [1, 1, 1]} : vector<4x8x8xf32> to vector<4x8x1xf32>
    %72 = vector.extract_strided_slice %67 {offsets = [0, 0, 0], sizes = [4, 1, 8], strides = [1, 1, 1]} : vector<4x8x8xf32> to vector<4x1x8xf32>
    %73 = vector.extract_strided_slice %67 {offsets = [0, 0, 0], sizes = [4, 1, 1], strides = [1, 1, 1]} : vector<4x8x8xf32> to vector<4x1x1xf32>
    %74 = math.rsqrt %73 : vector<4x1x1xf32>
    %c0_i32 = arith.constant 0 : i32
    %75 = vector.broadcast %c0_i32 : i32 to vector<4x8x1xi32>
    %76 = arith.cmpi sgt, %68, %75 : vector<4x8x1xi32>
    %cst_21 = arith.constant 0.000000e+00 : f32
    %77 = vector.broadcast %cst_21 : f32 to vector<4x8x1xf32>
    %78 = arith.select %76, %71, %77 : vector<4x8x1xi1>, vector<4x8x1xf32>
    %79 = vector.broadcast %74 : vector<4x1x1xf32> to vector<4x8x1xf32>
    %80 = arith.mulf %78, %79 : vector<4x8x1xf32>
    %c0_i32_22 = arith.constant 0 : i32
    %81 = vector.broadcast %c0_i32_22 : i32 to vector<4x1x8xi32>
    %82 = arith.cmpi sgt, %69, %81 : vector<4x1x8xi32>
    %cst_23 = arith.constant 0.000000e+00 : f32
    %83 = vector.broadcast %cst_23 : f32 to vector<4x1x8xf32>
    %84 = arith.select %82, %72, %83 : vector<4x1x8xi1>, vector<4x1x8xf32>
    %85 = vector.broadcast %74 : vector<4x1x1xf32> to vector<4x1x8xf32>
    %86 = arith.mulf %84, %85 : vector<4x1x8xf32>
    %87 = vector.broadcast %80 : vector<4x8x1xf32> to vector<4x8x8xf32>
    %88 = vector.broadcast %86 : vector<4x1x8xf32> to vector<4x8x8xf32>
    %89 = arith.mulf %87, %88 : vector<4x8x8xf32>
    %90 = arith.subf %67, %89 : vector<4x8x8xf32>
    %91 = math.log %73 : vector<4x1x1xf32>
    %cst_24 = arith.constant 2.000000e+00 : f32
    %92 = math.log %cst_24 : f32
    %93 = vector.broadcast %92 : f32 to vector<4x1x1xf32>
    %94 = arith.divf %91, %93 : vector<4x1x1xf32>
    %95 = arith.addf %70, %94 : vector<4x1x1xf32>
    %96 = vector.extract_strided_slice %90 {offsets = [0, 0, 1], sizes = [4, 8, 1], strides = [1, 1, 1]} : vector<4x8x8xf32> to vector<4x8x1xf32>
    %97 = vector.extract_strided_slice %90 {offsets = [0, 1, 0], sizes = [4, 1, 8], strides = [1, 1, 1]} : vector<4x8x8xf32> to vector<4x1x8xf32>
    %98 = vector.extract_strided_slice %90 {offsets = [0, 1, 1], sizes = [4, 1, 1], strides = [1, 1, 1]} : vector<4x8x8xf32> to vector<4x1x1xf32>
    %99 = math.rsqrt %98 : vector<4x1x1xf32>
    %c1_i32 = arith.constant 1 : i32
    %100 = vector.broadcast %c1_i32 : i32 to vector<4x8x1xi32>
    %101 = arith.cmpi sgt, %68, %100 : vector<4x8x1xi32>
    %cst_25 = arith.constant 0.000000e+00 : f32
    %102 = vector.broadcast %cst_25 : f32 to vector<4x8x1xf32>
    %103 = arith.select %101, %96, %102 : vector<4x8x1xi1>, vector<4x8x1xf32>
    %104 = vector.broadcast %99 : vector<4x1x1xf32> to vector<4x8x1xf32>
    %105 = arith.mulf %103, %104 : vector<4x8x1xf32>
    %c1_i32_26 = arith.constant 1 : i32
    %106 = vector.broadcast %c1_i32_26 : i32 to vector<4x1x8xi32>
    %107 = arith.cmpi sgt, %69, %106 : vector<4x1x8xi32>
    %cst_27 = arith.constant 0.000000e+00 : f32
    %108 = vector.broadcast %cst_27 : f32 to vector<4x1x8xf32>
    %109 = arith.select %107, %97, %108 : vector<4x1x8xi1>, vector<4x1x8xf32>
    %110 = vector.broadcast %99 : vector<4x1x1xf32> to vector<4x1x8xf32>
    %111 = arith.mulf %109, %110 : vector<4x1x8xf32>
    %112 = vector.broadcast %105 : vector<4x8x1xf32> to vector<4x8x8xf32>
    %113 = vector.broadcast %111 : vector<4x1x8xf32> to vector<4x8x8xf32>
    %114 = arith.mulf %112, %113 : vector<4x8x8xf32>
    %115 = arith.subf %90, %114 : vector<4x8x8xf32>
    %116 = math.log %98 : vector<4x1x1xf32>
    %cst_28 = arith.constant 2.000000e+00 : f32
    %117 = math.log %cst_28 : f32
    %118 = vector.broadcast %117 : f32 to vector<4x1x1xf32>
    %119 = arith.divf %116, %118 : vector<4x1x1xf32>
    %120 = arith.addf %95, %119 : vector<4x1x1xf32>
    %121 = vector.extract_strided_slice %115 {offsets = [0, 0, 2], sizes = [4, 8, 1], strides = [1, 1, 1]} : vector<4x8x8xf32> to vector<4x8x1xf32>
    %122 = vector.extract_strided_slice %115 {offsets = [0, 2, 0], sizes = [4, 1, 8], strides = [1, 1, 1]} : vector<4x8x8xf32> to vector<4x1x8xf32>
    %123 = vector.extract_strided_slice %115 {offsets = [0, 2, 2], sizes = [4, 1, 1], strides = [1, 1, 1]} : vector<4x8x8xf32> to vector<4x1x1xf32>
    %124 = math.rsqrt %123 : vector<4x1x1xf32>
    %c2_i32 = arith.constant 2 : i32
    %125 = vector.broadcast %c2_i32 : i32 to vector<4x8x1xi32>
    %126 = arith.cmpi sgt, %68, %125 : vector<4x8x1xi32>
    %cst_29 = arith.constant 0.000000e+00 : f32
    %127 = vector.broadcast %cst_29 : f32 to vector<4x8x1xf32>
    %128 = arith.select %126, %121, %127 : vector<4x8x1xi1>, vector<4x8x1xf32>
    %129 = vector.broadcast %124 : vector<4x1x1xf32> to vector<4x8x1xf32>
    %130 = arith.mulf %128, %129 : vector<4x8x1xf32>
    %c2_i32_30 = arith.constant 2 : i32
    %131 = vector.broadcast %c2_i32_30 : i32 to vector<4x1x8xi32>
    %132 = arith.cmpi sgt, %69, %131 : vector<4x1x8xi32>
    %cst_31 = arith.constant 0.000000e+00 : f32
    %133 = vector.broadcast %cst_31 : f32 to vector<4x1x8xf32>
    %134 = arith.select %132, %122, %133 : vector<4x1x8xi1>, vector<4x1x8xf32>
    %135 = vector.broadcast %124 : vector<4x1x1xf32> to vector<4x1x8xf32>
    %136 = arith.mulf %134, %135 : vector<4x1x8xf32>
    %137 = vector.broadcast %130 : vector<4x8x1xf32> to vector<4x8x8xf32>
    %138 = vector.broadcast %136 : vector<4x1x8xf32> to vector<4x8x8xf32>
    %139 = arith.mulf %137, %138 : vector<4x8x8xf32>
    %140 = arith.subf %115, %139 : vector<4x8x8xf32>
    %141 = math.log %123 : vector<4x1x1xf32>
    %cst_32 = arith.constant 2.000000e+00 : f32
    %142 = math.log %cst_32 : f32
    %143 = vector.broadcast %142 : f32 to vector<4x1x1xf32>
    %144 = arith.divf %141, %143 : vector<4x1x1xf32>
    %145 = arith.addf %120, %144 : vector<4x1x1xf32>
    %146 = vector.extract_strided_slice %140 {offsets = [0, 0, 3], sizes = [4, 8, 1], strides = [1, 1, 1]} : vector<4x8x8xf32> to vector<4x8x1xf32>
    %147 = vector.extract_strided_slice %140 {offsets = [0, 3, 0], sizes = [4, 1, 8], strides = [1, 1, 1]} : vector<4x8x8xf32> to vector<4x1x8xf32>
    %148 = vector.extract_strided_slice %140 {offsets = [0, 3, 3], sizes = [4, 1, 1], strides = [1, 1, 1]} : vector<4x8x8xf32> to vector<4x1x1xf32>
    %149 = math.rsqrt %148 : vector<4x1x1xf32>
    %c3_i32 = arith.constant 3 : i32
    %150 = vector.broadcast %c3_i32 : i32 to vector<4x8x1xi32>
    %151 = arith.cmpi sgt, %68, %150 : vector<4x8x1xi32>
    %cst_33 = arith.constant 0.000000e+00 : f32
    %152 = vector.broadcast %cst_33 : f32 to vector<4x8x1xf32>
    %153 = arith.select %151, %146, %152 : vector<4x8x1xi1>, vector<4x8x1xf32>
    %154 = vector.broadcast %149 : vector<4x1x1xf32> to vector<4x8x1xf32>
    %155 = arith.mulf %153, %154 : vector<4x8x1xf32>
    %c3_i32_34 = arith.constant 3 : i32
    %156 = vector.broadcast %c3_i32_34 : i32 to vector<4x1x8xi32>
    %157 = arith.cmpi sgt, %69, %156 : vector<4x1x8xi32>
    %cst_35 = arith.constant 0.000000e+00 : f32
    %158 = vector.broadcast %cst_35 : f32 to vector<4x1x8xf32>
    %159 = arith.select %157, %147, %158 : vector<4x1x8xi1>, vector<4x1x8xf32>
    %160 = vector.broadcast %149 : vector<4x1x1xf32> to vector<4x1x8xf32>
    %161 = arith.mulf %159, %160 : vector<4x1x8xf32>
    %162 = vector.broadcast %155 : vector<4x8x1xf32> to vector<4x8x8xf32>
    %163 = vector.broadcast %161 : vector<4x1x8xf32> to vector<4x8x8xf32>
    %164 = arith.mulf %162, %163 : vector<4x8x8xf32>
    %165 = arith.subf %140, %164 : vector<4x8x8xf32>
    %166 = math.log %148 : vector<4x1x1xf32>
    %cst_36 = arith.constant 2.000000e+00 : f32
    %167 = math.log %cst_36 : f32
    %168 = vector.broadcast %167 : f32 to vector<4x1x1xf32>
    %169 = arith.divf %166, %168 : vector<4x1x1xf32>
    %170 = arith.addf %145, %169 : vector<4x1x1xf32>
    %171 = vector.extract_strided_slice %165 {offsets = [0, 0, 4], sizes = [4, 8, 1], strides = [1, 1, 1]} : vector<4x8x8xf32> to vector<4x8x1xf32>
    %172 = vector.extract_strided_slice %165 {offsets = [0, 4, 0], sizes = [4, 1, 8], strides = [1, 1, 1]} : vector<4x8x8xf32> to vector<4x1x8xf32>
    %173 = vector.extract_strided_slice %165 {offsets = [0, 4, 4], sizes = [4, 1, 1], strides = [1, 1, 1]} : vector<4x8x8xf32> to vector<4x1x1xf32>
    %174 = math.rsqrt %173 : vector<4x1x1xf32>
    %c4_i32 = arith.constant 4 : i32
    %175 = vector.broadcast %c4_i32 : i32 to vector<4x8x1xi32>
    %176 = arith.cmpi sgt, %68, %175 : vector<4x8x1xi32>
    %cst_37 = arith.constant 0.000000e+00 : f32
    %177 = vector.broadcast %cst_37 : f32 to vector<4x8x1xf32>
    %178 = arith.select %176, %171, %177 : vector<4x8x1xi1>, vector<4x8x1xf32>
    %179 = vector.broadcast %174 : vector<4x1x1xf32> to vector<4x8x1xf32>
    %180 = arith.mulf %178, %179 : vector<4x8x1xf32>
    %c4_i32_38 = arith.constant 4 : i32
    %181 = vector.broadcast %c4_i32_38 : i32 to vector<4x1x8xi32>
    %182 = arith.cmpi sgt, %69, %181 : vector<4x1x8xi32>
    %cst_39 = arith.constant 0.000000e+00 : f32
    %183 = vector.broadcast %cst_39 : f32 to vector<4x1x8xf32>
    %184 = arith.select %182, %172, %183 : vector<4x1x8xi1>, vector<4x1x8xf32>
    %185 = vector.broadcast %174 : vector<4x1x1xf32> to vector<4x1x8xf32>
    %186 = arith.mulf %184, %185 : vector<4x1x8xf32>
    %187 = vector.broadcast %180 : vector<4x8x1xf32> to vector<4x8x8xf32>
    %188 = vector.broadcast %186 : vector<4x1x8xf32> to vector<4x8x8xf32>
    %189 = arith.mulf %187, %188 : vector<4x8x8xf32>
    %190 = arith.subf %165, %189 : vector<4x8x8xf32>
    %191 = math.log %173 : vector<4x1x1xf32>
    %cst_40 = arith.constant 2.000000e+00 : f32
    %192 = math.log %cst_40 : f32
    %193 = vector.broadcast %192 : f32 to vector<4x1x1xf32>
    %194 = arith.divf %191, %193 : vector<4x1x1xf32>
    %195 = arith.addf %170, %194 : vector<4x1x1xf32>
    %196 = vector.extract_strided_slice %190 {offsets = [0, 0, 5], sizes = [4, 8, 1], strides = [1, 1, 1]} : vector<4x8x8xf32> to vector<4x8x1xf32>
    %197 = vector.extract_strided_slice %190 {offsets = [0, 5, 0], sizes = [4, 1, 8], strides = [1, 1, 1]} : vector<4x8x8xf32> to vector<4x1x8xf32>
    %198 = vector.extract_strided_slice %190 {offsets = [0, 5, 5], sizes = [4, 1, 1], strides = [1, 1, 1]} : vector<4x8x8xf32> to vector<4x1x1xf32>
    %199 = math.rsqrt %198 : vector<4x1x1xf32>
    %c5_i32 = arith.constant 5 : i32
    %200 = vector.broadcast %c5_i32 : i32 to vector<4x8x1xi32>
    %201 = arith.cmpi sgt, %68, %200 : vector<4x8x1xi32>
    %cst_41 = arith.constant 0.000000e+00 : f32
    %202 = vector.broadcast %cst_41 : f32 to vector<4x8x1xf32>
    %203 = arith.select %201, %196, %202 : vector<4x8x1xi1>, vector<4x8x1xf32>
    %204 = vector.broadcast %199 : vector<4x1x1xf32> to vector<4x8x1xf32>
    %205 = arith.mulf %203, %204 : vector<4x8x1xf32>
    %c5_i32_42 = arith.constant 5 : i32
    %206 = vector.broadcast %c5_i32_42 : i32 to vector<4x1x8xi32>
    %207 = arith.cmpi sgt, %69, %206 : vector<4x1x8xi32>
    %cst_43 = arith.constant 0.000000e+00 : f32
    %208 = vector.broadcast %cst_43 : f32 to vector<4x1x8xf32>
    %209 = arith.select %207, %197, %208 : vector<4x1x8xi1>, vector<4x1x8xf32>
    %210 = vector.broadcast %199 : vector<4x1x1xf32> to vector<4x1x8xf32>
    %211 = arith.mulf %209, %210 : vector<4x1x8xf32>
    %212 = vector.broadcast %205 : vector<4x8x1xf32> to vector<4x8x8xf32>
    %213 = vector.broadcast %211 : vector<4x1x8xf32> to vector<4x8x8xf32>
    %214 = arith.mulf %212, %213 : vector<4x8x8xf32>
    %215 = arith.subf %190, %214 : vector<4x8x8xf32>
    %216 = math.log %198 : vector<4x1x1xf32>
    %cst_44 = arith.constant 2.000000e+00 : f32
    %217 = math.log %cst_44 : f32
    %218 = vector.broadcast %217 : f32 to vector<4x1x1xf32>
    %219 = arith.divf %216, %218 : vector<4x1x1xf32>
    %220 = arith.addf %195, %219 : vector<4x1x1xf32>
    %221 = vector.extract_strided_slice %215 {offsets = [0, 0, 6], sizes = [4, 8, 1], strides = [1, 1, 1]} : vector<4x8x8xf32> to vector<4x8x1xf32>
    %222 = vector.extract_strided_slice %215 {offsets = [0, 6, 0], sizes = [4, 1, 8], strides = [1, 1, 1]} : vector<4x8x8xf32> to vector<4x1x8xf32>
    %223 = vector.extract_strided_slice %215 {offsets = [0, 6, 6], sizes = [4, 1, 1], strides = [1, 1, 1]} : vector<4x8x8xf32> to vector<4x1x1xf32>
    %224 = math.rsqrt %223 : vector<4x1x1xf32>
    %c6_i32 = arith.constant 6 : i32
    %225 = vector.broadcast %c6_i32 : i32 to vector<4x8x1xi32>
    %226 = arith.cmpi sgt, %68, %225 : vector<4x8x1xi32>
    %cst_45 = arith.constant 0.000000e+00 : f32
    %227 = vector.broadcast %cst_45 : f32 to vector<4x8x1xf32>
    %228 = arith.select %226, %221, %227 : vector<4x8x1xi1>, vector<4x8x1xf32>
    %229 = vector.broadcast %224 : vector<4x1x1xf32> to vector<4x8x1xf32>
    %230 = arith.mulf %228, %229 : vector<4x8x1xf32>
    %c6_i32_46 = arith.constant 6 : i32
    %231 = vector.broadcast %c6_i32_46 : i32 to vector<4x1x8xi32>
    %232 = arith.cmpi sgt, %69, %231 : vector<4x1x8xi32>
    %cst_47 = arith.constant 0.000000e+00 : f32
    %233 = vector.broadcast %cst_47 : f32 to vector<4x1x8xf32>
    %234 = arith.select %232, %222, %233 : vector<4x1x8xi1>, vector<4x1x8xf32>
    %235 = vector.broadcast %224 : vector<4x1x1xf32> to vector<4x1x8xf32>
    %236 = arith.mulf %234, %235 : vector<4x1x8xf32>
    %237 = vector.broadcast %230 : vector<4x8x1xf32> to vector<4x8x8xf32>
    %238 = vector.broadcast %236 : vector<4x1x8xf32> to vector<4x8x8xf32>
    %239 = arith.mulf %237, %238 : vector<4x8x8xf32>
    %240 = arith.subf %215, %239 : vector<4x8x8xf32>
    %241 = math.log %223 : vector<4x1x1xf32>
    %cst_48 = arith.constant 2.000000e+00 : f32
    %242 = math.log %cst_48 : f32
    %243 = vector.broadcast %242 : f32 to vector<4x1x1xf32>
    %244 = arith.divf %241, %243 : vector<4x1x1xf32>
    %245 = arith.addf %220, %244 : vector<4x1x1xf32>
    %246 = vector.extract_strided_slice %240 {offsets = [0, 7, 7], sizes = [4, 1, 1], strides = [1, 1, 1]} : vector<4x8x8xf32> to vector<4x1x1xf32>
    %247 = math.log %246 : vector<4x1x1xf32>
    %cst_49 = arith.constant 2.000000e+00 : f32
    %248 = math.log %cst_49 : f32
    %249 = vector.broadcast %248 : f32 to vector<4x1x1xf32>
    %250 = arith.divf %247, %249 : vector<4x1x1xf32>
    %251 = arith.addf %245, %250 : vector<4x1x1xf32>
    %cst_50 = arith.constant 0.000000e+00 : f32
    %252 = vector.broadcast %cst_50 : f32 to vector<8x128xf32>
    %c0_51 = arith.constant 0 : index
    %c0_52 = arith.constant 0 : index
    %253 = vector.load %arg5[%c0_51, %c0_52] : memref<8x128xf32, #tpu.memory_space<vmem>>, vector<8x128xf32>
    tpu.vector_store %arg5[%c0_51, %c0_52], %252 {strides = array<i32>} : memref<8x128xf32, #tpu.memory_space<vmem>>, vector<8x128xf32>,
    %c0_53 = arith.constant 0 : index
    %c0_54 = arith.constant 0 : index
    %254 = vector.load %arg5[%c0_53, %c0_54] : memref<8x128xf32, #tpu.memory_space<vmem>>, vector<8x8xf32>
    tpu.vector_store %arg5[%c0_53, %c0_54], %56 {strides = array<i32>} : memref<8x128xf32, #tpu.memory_space<vmem>>, vector<8x8xf32>,
    %c0_55 = arith.constant 0 : index
    %c8 = arith.constant 8 : index
    %255 = vector.load %arg5[%c0_55, %c8] : memref<8x128xf32, #tpu.memory_space<vmem>>, vector<8x8xf32>
    tpu.vector_store %arg5[%c0_55, %c8], %58 {strides = array<i32>} : memref<8x128xf32, #tpu.memory_space<vmem>>, vector<8x8xf32>,
    %c0_56 = arith.constant 0 : index
    %c16 = arith.constant 16 : index
    %256 = vector.load %arg5[%c0_56, %c16] : memref<8x128xf32, #tpu.memory_space<vmem>>, vector<8x8xf32>
    tpu.vector_store %arg5[%c0_56, %c16], %60 {strides = array<i32>} : memref<8x128xf32, #tpu.memory_space<vmem>>, vector<8x8xf32>,
    %c0_57 = arith.constant 0 : index
    %c24 = arith.constant 24 : index
    %257 = vector.load %arg5[%c0_57, %c24] : memref<8x128xf32, #tpu.memory_space<vmem>>, vector<8x8xf32>
    tpu.vector_store %arg5[%c0_57, %c24], %62 {strides = array<i32>} : memref<8x128xf32, #tpu.memory_space<vmem>>, vector<8x8xf32>,
    %c0_58 = arith.constant 0 : index
    %c32 = arith.constant 32 : index
    %258 = vector.load %arg5[%c0_58, %c32] : memref<8x128xf32, #tpu.memory_space<vmem>>, vector<2x8xf32>
    tpu.vector_store %arg5[%c0_58, %c32], %14 {strides = array<i32>} : memref<8x128xf32, #tpu.memory_space<vmem>>, vector<2x8xf32>,
    %c0_59 = arith.constant 0 : index
    %c40 = arith.constant 40 : index
    %259 = vector.load %arg5[%c0_59, %c40] : memref<8x128xf32, #tpu.memory_space<vmem>>, vector<2x8xf32>
    tpu.vector_store %arg5[%c0_59, %c40], %18 {strides = array<i32>} : memref<8x128xf32, #tpu.memory_space<vmem>>, vector<2x8xf32>,
    %260 = tpu.iota {dimensions = array<i32: 1>} : vector<1x4xi32>
    %cst_60 = arith.constant 0.000000e+00 : f32
    %261 = vector.broadcast %cst_60 : f32 to vector<1x4xf32>
    %c0_i32_61 = arith.constant 0 : i32
    %262 = vector.broadcast %c0_i32_61 : i32 to vector<1x4xi32>
    %263 = arith.cmpi eq, %260, %262 : vector<1x4xi32>
    %264 = vector.extract_strided_slice %251 {offsets = [0, 0, 0], sizes = [1, 1, 1], strides = [1, 1, 1]} : vector<4x1x1xf32> to vector<1x1x1xf32>
    %265 = vector.shape_cast %264 : vector<1x1x1xf32> to vector<1x1xf32>
    %cst_62 = arith.constant 0.000000e+00 : f32
    %266 = vector.shape_cast %265 : vector<1x1xf32> to vector<1x1xf32>
    %267 = vector.broadcast %266 : vector<1x1xf32> to vector<1x4xf32>
    %268 = vector.broadcast %cst_62 : f32 to vector<1x4xf32>
    %269 = arith.select %263, %267, %268 : vector<1x4xi1>, vector<1x4xf32>
    %270 = arith.addf %261, %269 : vector<1x4xf32>
    %c1_i32_63 = arith.constant 1 : i32
    %271 = vector.broadcast %c1_i32_63 : i32 to vector<1x4xi32>
    %272 = arith.cmpi eq, %260, %271 : vector<1x4xi32>
    %273 = vector.extract_strided_slice %251 {offsets = [1, 0, 0], sizes = [1, 1, 1], strides = [1, 1, 1]} : vector<4x1x1xf32> to vector<1x1x1xf32>
    %274 = vector.shape_cast %273 : vector<1x1x1xf32> to vector<1x1xf32>
    %cst_64 = arith.constant 0.000000e+00 : f32
    %275 = vector.shape_cast %274 : vector<1x1xf32> to vector<1x1xf32>
    %276 = vector.broadcast %275 : vector<1x1xf32> to vector<1x4xf32>
    %277 = vector.broadcast %cst_64 : f32 to vector<1x4xf32>
    %278 = arith.select %272, %276, %277 : vector<1x4xi1>, vector<1x4xf32>
    %279 = arith.addf %270, %278 : vector<1x4xf32>
    %c2_i32_65 = arith.constant 2 : i32
    %280 = vector.broadcast %c2_i32_65 : i32 to vector<1x4xi32>
    %281 = arith.cmpi eq, %260, %280 : vector<1x4xi32>
    %282 = vector.extract_strided_slice %251 {offsets = [2, 0, 0], sizes = [1, 1, 1], strides = [1, 1, 1]} : vector<4x1x1xf32> to vector<1x1x1xf32>
    %283 = vector.shape_cast %282 : vector<1x1x1xf32> to vector<1x1xf32>
    %cst_66 = arith.constant 0.000000e+00 : f32
    %284 = vector.shape_cast %283 : vector<1x1xf32> to vector<1x1xf32>
    %285 = vector.broadcast %284 : vector<1x1xf32> to vector<1x4xf32>
    %286 = vector.broadcast %cst_66 : f32 to vector<1x4xf32>
    %287 = arith.select %281, %285, %286 : vector<1x4xi1>, vector<1x4xf32>
    %288 = arith.addf %279, %287 : vector<1x4xf32>
    %c3_i32_67 = arith.constant 3 : i32
    %289 = vector.broadcast %c3_i32_67 : i32 to vector<1x4xi32>
    %290 = arith.cmpi eq, %260, %289 : vector<1x4xi32>
    %291 = vector.extract_strided_slice %251 {offsets = [3, 0, 0], sizes = [1, 1, 1], strides = [1, 1, 1]} : vector<4x1x1xf32> to vector<1x1x1xf32>
    %292 = vector.shape_cast %291 : vector<1x1x1xf32> to vector<1x1xf32>
    %cst_68 = arith.constant 0.000000e+00 : f32
    %293 = vector.shape_cast %292 : vector<1x1xf32> to vector<1x1xf32>
    %294 = vector.broadcast %293 : vector<1x1xf32> to vector<1x4xf32>
    %295 = vector.broadcast %cst_68 : f32 to vector<1x4xf32>
    %296 = arith.select %290, %294, %295 : vector<1x4xi1>, vector<1x4xf32>
    %297 = arith.addf %288, %296 : vector<1x4xf32>
    %c0_69 = arith.constant 0 : index
    %c48 = arith.constant 48 : index
    %298 = vector.load %arg5[%c0_69, %c48] : memref<8x128xf32, #tpu.memory_space<vmem>>, vector<1x4xf32>
    tpu.vector_store %arg5[%c0_69, %c48], %297 {strides = array<i32>} : memref<8x128xf32, #tpu.memory_space<vmem>>, vector<1x4xf32>,
    return
  }
  func.func @transform_0(%arg0: i32) -> (i32, i32) {
    %c0_i32 = arith.constant 0 : i32
    %c0_i32_0 = arith.constant 0 : i32
    %c0_i32_1 = arith.constant 0 : i32
    return %c0_i32, %c0_i32_0 : i32, i32
  }
  func.func @transform_1(%arg0: i32) -> (i32, i32) {
    %c0_i32 = arith.constant 0 : i32
    %c0_i32_0 = arith.constant 0 : i32
    %c0_i32_1 = arith.constant 0 : i32
    return %c0_i32, %c0_i32_0 : i32, i32
  }
  func.func @transform_2(%arg0: i32) -> (i32, i32) {
    %c0_i32 = arith.constant 0 : i32
    %c0_i32_0 = arith.constant 0 : i32
    %c0_i32_1 = arith.constant 0 : i32
    return %c0_i32, %c0_i32_0 : i32, i32
  }
  func.func @transform_3(%arg0: i32) -> (i32, i32) {
    %c0_i32 = arith.constant 0 : i32
    %c0_i32_0 = arith.constant 0 : i32
    %c0_i32_1 = arith.constant 0 : i32
    return %c0_i32, %c0_i32_0 : i32, i32
  }
  func.func @transform_4(%arg0: i32) -> (i32, i32) {
    %c0_i32 = arith.constant 0 : i32
    %c0_i32_0 = arith.constant 0 : i32
    %c0_i32_1 = arith.constant 0 : i32
    return %c0_i32, %c0_i32_0 : i32, i32
  }
}

</mosaic_0001>

<llo_original>
// kernel: tpu_custom_call.1
$region0: #{tpu_custom_call.1}
  #allocation0 [shape = 'u32[]', space=smem, size = 0x4, offset = 0x4, fixed_abs, tag = 'smem constant byte address 0x4 - core index']
  #allocation1 [shape = 'u32[72,128]{1,0:T(1,128)}', space=vmem, size = 0x9000, scoped, tag = 'internal scratch']
  %s0 = inlined_call_operand.vmem [shape: f32[4,32], index: 0, kind: input, shape index: {}]
  %s1 = inlined_call_operand.vmem [shape: f32[4,8], index: 1, kind: input, shape index: {}]
  %s2 = inlined_call_operand.vmem [shape: f32[32,8], index: 2, kind: input, shape index: {}]
  %s3 = inlined_call_operand.vmem [shape: f32[32,32], index: 3, kind: input, shape index: {}]
  %s4 = inlined_call_operand.hbm [shape: f32[8,128], index: 4, kind: output, shape index: {}]
  %s5 = sld [smem:[#allocation0]]
  $region26: #{tpu_custom_call.1} parent=0
    _
  %s7 = ssub.s32 1, %s5
  %s8 = scalar_select 0, %s7, %s5
  $region1: #{tpu_custom_call.1} parent=0
    #allocation2 [shape = 'u8[4096]{0}', space=vmem, size = 0x1000, scoped, tag = 'output window, operand 0, single buffered']
    #allocation3 [shape = 's32[1]{0}', space=sflag, size = 0x4, scoped, tag = 'scoped memory for tpu_custom_call.1']
    %9 = vsyncpa [#allocation3], 0
    // Predicated region
    $region2: #{tpu_custom_call.1} parent=1 // pred_check
      _
    $region3: #{tpu_custom_call.1} parent=1 // pred_check_branch
      %11 = sbr.rel (0) target = $region5
    $region4: #{tpu_custom_call.1} parent=1 // pred_region
      _
    $region5: #{tpu_custom_call.1} parent=1 // pred_fallthru
      _
    // Predicated region
    $region6: #{tpu_custom_call.1} parent=1 // pred_check
      _
    $region7: #{tpu_custom_call.1} parent=1 // pred_check_branch
      %13 = sbr.rel (0) target = $region9
    $region8: #{tpu_custom_call.1} parent=1 // pred_region
      _
    $region9: #{tpu_custom_call.1} parent=1 // pred_fallthru
      _
    // Predicated region
    $region10: #{tpu_custom_call.1} parent=1 // pred_check
      _
    $region11: #{tpu_custom_call.1} parent=1 // pred_check_branch
      %15 = sbr.rel (0) target = $region13
    $region12: #{tpu_custom_call.1} parent=1 // pred_region
      _
    $region13: #{tpu_custom_call.1} parent=1 // pred_fallthru
      _
    // Predicated region
    $region14: #{tpu_custom_call.1} parent=1 // pred_check
      _
    $region15: #{tpu_custom_call.1} parent=1 // pred_check_branch
      %17 = sbr.rel (0) target = $region17
    $region16: #{tpu_custom_call.1} parent=1 // pred_region
      _
    $region17: #{tpu_custom_call.1} parent=1 // pred_fallthru
      _
    %v18 = vld [vmem:[%s2] sm:$0xff]
    %v19 = vld [vmem:[%s2 + $0x8] sm:$0xff]
    %v20 = vld [vmem:[%s2 + $0x10] sm:$0xff]
    %v21 = vld [vmem:[%s2 + $0x18] sm:$0xff]
    %v22 = vld [vmem:[%s1] sm:$0x1]
    %v23 = vld [vmem:[%s1 + $0x1] sm:$0x1]
    %v24 = vld [vmem:[%s1 + $0x2] sm:$0x3]
    %v25 = vmul.f32 %v22, 1.442695
    %v26 = vpow.pop %v25
    %v27 = vmul.f32 %v23, 1.442695
    %v28 = vpow.pop %v27
    %v29 = vld [vmem:[%s0] sm:$0x3]
    %v30 = vld [vmem:[%s0 + $0x2] sm:$0x3]
    %v31 = vadd.f32 %v29, %v30
    %vm32 = vcmask 261120
    %v34 = vsel %vm32, %v31, 0
    %36 = vmatpush.msra.mxu0 0.0
    %37 = vmatpush.msra.mxu0 0.0
    %38 = vmatpush.msra.mxu0 0.0
    %39 = vmatpush.msra.mxu0 0.0
    %40 = vmatpush.msra.mxu0 0.0
    %41 = vmatpush.msra.mxu0 0.0
    %42 = vmatpush.msra.mxu0 0.0
    %43 = vmatpush.msra.mxu0 0.0
    %44 = vmatpush.msra.mxu0 0.0
    %45 = vmatpush.msra.mxu0 0.0
    %46 = vmatpush.msra.mxu0 0.0
    %47 = vmatpush.msra.mxu0 0.0
    %48 = vmatpush.msra.mxu0 %v21
    %49 = vmatpush.msra.mxu0 %v20
    %50 = vmatpush.msra.mxu0 %v19
    %51 = vmatpush.msra.mxu0 %v18
    %52 = vmatmul.f32.gmra.mxu0 %v34
    %v53 = vpop.f32.mrf.mxu0
    %v54 = vadd.f32 0.0, %v53
    %55 = vdwg.mxu0
    %v56 = vperm.slane %v28, 0
    %v57 = vsub.f32 %v54, %v56
    %v58 = vperm.slane %v26, 0
    %v59 = vmul.f32 %v58, %v57
    %v60 = vadd.f32 %v59, %v24
    %v61 = vmax.f32 %v57, 0.0
    %v62 = vmul.f32 %v58, %v61
    %vm63 = vcmp.gt.f32.partialorder %v57, 0.0
    %v64 = vsel %vm63, 1, 0
    %v65 = vcvt.s32.f32 %v64
    %v66 = vmul.f32 %v58, %v65
    %67 = vxpose.xlu0.b32.start [1/16] %v18, 128
    %68 = vxpose.xlu0.b32.cont [2/16] %v19, 128
    %69 = vxpose.xlu0.b32.cont [3/16] %v20, 128
    %70 = vxpose.xlu0.b32.cont [4/16] %v21, 128
    %71 = vxpose.xlu0.b32.cont [5/16] 0.0, 128
    %72 = vxpose.xlu0.b32.cont [6/16] 0.0, 128
    %73 = vxpose.xlu0.b32.cont [7/16] 0.0, 128
    %74 = vxpose.xlu0.b32.cont [8/16] 0.0, 128
    %75 = vxpose.xlu0.b32.cont [9/16] 0.0, 128
    %76 = vxpose.xlu0.b32.cont [10/16] 0.0, 128
    %77 = vxpose.xlu0.b32.cont [11/16] 0.0, 128
    %78 = vxpose.xlu0.b32.cont [12/16] 0.0, 128
    %79 = vxpose.xlu0.b32.cont [13/16] 0.0, 128
    %80 = vxpose.xlu0.b32.cont [14/16] 0.0, 128
    %81 = vxpose.xlu0.b32.cont [15/16] 0.0, 128
    %82 = vxpose.xlu0.b32.end [16/16] 0.0, 128
    %v83 = vpop.trf.xlu0
    %v84 = vpop.trf.xlu0
    %v85 = vpop.trf.xlu0
    %v86 = vpop.trf.xlu0
    %v87 = vpop.trf.xlu0
    %v88 = vpop.trf.xlu0
    %v89 = vpop.trf.xlu0
    %v90 = vpop.trf.xlu0
    %v91 = vpop.trf.xlu0
    %v92 = vpop.trf.xlu0
    %v93 = vpop.trf.xlu0
    %v94 = vpop.trf.xlu0
    %v95 = vpop.trf.xlu0
    %v96 = vpop.trf.xlu0
    %v97 = vpop.trf.xlu0
    %v98 = vpop.trf.xlu0
    %v100 = vsel %vm32, %v83, 0
    %102 = vmatpush.msra.mxu0 0.0
    %103 = vmatpush.msra.mxu0 0.0
    %104 = vmatpush.msra.mxu0 0.0
    %105 = vmatpush.msra.mxu0 0.0
    %106 = vmatpush.msra.mxu0 0.0
    %107 = vmatpush.msra.mxu0 0.0
    %108 = vmatpush.msra.mxu0 0.0
    %109 = vmatpush.msra.mxu0 0.0
    %110 = vmatpush.msra.mxu0 0.0
    %111 = vmatpush.msra.mxu0 0.0
    %112 = vmatpush.msra.mxu0 0.0
    %113 = vmatpush.msra.mxu0 0.0
    %114 = vmatpush.msra.mxu0 %v21
    %115 = vmatpush.msra.mxu0 %v20
    %116 = vmatpush.msra.mxu0 %v19
    %117 = vmatpush.msra.mxu0 %v18
    %118 = vmatmul.f32.gmra.mxu0 %v100
    %v119 = vpop.f32.mrf.mxu0
    %v120 = vadd.f32 0.0, %v119
    %121 = vdwg.mxu0
    %v122 = vmul.f32 %v120, 0.16
    %v123 = vld [vmem:[%s3] sm:$0xff]
    %v124 = vld [vmem:[%s3 + $0x8] sm:$0xff]
    %v125 = vld [vmem:[%s3 + $0x10] sm:$0xff]
    %v126 = vld [vmem:[%s3 + $0x18] sm:$0xff]
    %v128 = vsel %vm32, %v123, 0
    %v131 = vsel %vm32, %v124, 0
    %v134 = vsel %vm32, %v125, 0
    %v137 = vsel %vm32, %v126, 0
    %139 = vmatpush.msra.mxu0 0.0
    %140 = vmatpush.msra.mxu0 0.0
    %141 = vmatpush.msra.mxu0 0.0
    %142 = vmatpush.msra.mxu0 0.0
    %143 = vmatpush.msra.mxu0 0.0
    %144 = vmatpush.msra.mxu0 0.0
    %145 = vmatpush.msra.mxu0 0.0
    %146 = vmatpush.msra.mxu0 0.0
    %147 = vmatpush.msra.mxu0 0.0
    %148 = vmatpush.msra.mxu0 0.0
    %149 = vmatpush.msra.mxu0 0.0
    %150 = vmatpush.msra.mxu0 0.0
    %151 = vmatpush.msra.mxu0 %v21
    %152 = vmatpush.msra.mxu0 %v20
    %153 = vmatpush.msra.mxu0 %v19
    %154 = vmatpush.msra.mxu0 %v18
    %155 = vmatmul.f32.gmra.mxu0 %v128
    %v156 = vpop.f32.mrf.mxu0
    %v157 = vadd.f32 0.0, %v156
    %158 = vmatmul.f32.gmra.mxu0 %v131
    %v159 = vpop.f32.mrf.mxu0
    %v160 = vadd.f32 0.0, %v159
    %161 = vmatmul.f32.gmra.mxu0 %v134
    %v162 = vpop.f32.mrf.mxu0
    %v163 = vadd.f32 0.0, %v162
    %164 = vmatmul.f32.gmra.mxu0 %v137
    %v165 = vpop.f32.mrf.mxu0
    %v166 = vadd.f32 0.0, %v165
    %167 = vdwg.mxu0
    %168 = vmatpush.msra.mxu0 0.0
    %169 = vmatpush.msra.mxu0 0.0
    %170 = vmatpush.msra.mxu0 0.0
    %171 = vmatpush.msra.mxu0 0.0
    %172 = vmatpush.msra.mxu0 0.0
    %173 = vmatpush.msra.mxu0 0.0
    %174 = vmatpush.msra.mxu0 0.0
    %175 = vmatpush.msra.mxu0 0.0
    %176 = vmatpush.msra.mxu0 0.0
    %177 = vmatpush.msra.mxu0 0.0
    %178 = vmatpush.msra.mxu0 0.0
    %179 = vmatpush.msra.mxu0 0.0
    %180 = vmatpush.msra.mxu0 %v166
    %181 = vmatpush.msra.mxu0 %v163
    %182 = vmatpush.msra.mxu0 %v160
    %183 = vmatpush.msra.mxu0 %v157
    %184 = vmatmul.f32.gmra.mxu0 %v100
    %v185 = vpop.f32.mrf.mxu0
    %v186 = vadd.f32 %v122, %v185
    %187 = vdwg.mxu0
    %v188 = vlaneseq
    %v189 = vshrl.u32 %v188, 7
    %v190 = vlaneseq
    %v191 = vand.u32 %v190, 127
    %vm192 = vcmp.eq.s32.totalorder %v189, %v191
    %v193 = vsel %vm192, 1, 0
    %v194 = vcvt.s32.f32 %v193
    %v195 = vmul.f32 %v194, 0.36
    %v196 = vperm.slane %v66, 0
    %v197 = vmul.f32 %v194, %v196
    %vm198 = vcmask 64512
    %v199 = vsel %vm198, %v197, 0.0
    %200 = vadd.xlane.f32.xlu0 %v199
    %v201 = vpop.xlane.xlu0 %200
    %v202 = vmul.f32 %v201, %v196
    %v203 = vperm.slane %v66, 1
    %v204 = vmul.f32 %v194, %v203
    %v205 = vsel %vm198, %v204, 0.0
    %206 = vadd.xlane.f32.xlu0 %v205
    %v207 = vpop.xlane.xlu0 %206
    %v208 = vmul.f32 %v207, %v203
    %v209 = vmul.f32 %v202, %v186
    %v210 = vadd.f32 %v209, %v195
    %v211 = vmul.f32 %v208, %v186
    %v212 = vadd.f32 %v211, %v195
    %v213 = vmul.f32 %v202, %v122
    %v214 = vadd.f32 %v213, %v195
    %v215 = vmul.f32 %v208, %v122
    %v216 = vadd.f32 %v215, %v195
    %v217 = vrsqrt.pop %v210
    %v218 = vmul.f32 %v217, %v210
    %v219 = vmul.f32 %v218, %v217
    %v220 = vmul.f32 0.5, %v219
    %v221 = vsub.f32 1.5, %v220
    %v222 = vmul.f32 %v217, %v221
    %vm223 = vweird.f32 %v210
    %vm224 = vweird.f32 %v217
    %vm225 = vmor %vm223, %vm224
    %v226 = vsel %vm225, %v217, %v222
    %v227 = vrsqrt.pop %v212
    %v228 = vmul.f32 %v227, %v212
    %v229 = vmul.f32 %v228, %v227
    %v230 = vmul.f32 0.5, %v229
    %v231 = vsub.f32 1.5, %v230
    %v232 = vmul.f32 %v227, %v231
    %vm233 = vweird.f32 %v212
    %vm234 = vweird.f32 %v227
    %vm235 = vmor %vm233, %vm234
    %v236 = vsel %vm235, %v227, %v232
    %v237 = vrsqrt.pop %v214
    %v238 = vmul.f32 %v237, %v214
    %v239 = vmul.f32 %v238, %v237
    %v240 = vmul.f32 0.5, %v239
    %v241 = vsub.f32 1.5, %v240
    %v242 = vmul.f32 %v237, %v241
    %vm243 = vweird.f32 %v214
    %vm244 = vweird.f32 %v237
    %vm245 = vmor %vm243, %vm244
    %v246 = vsel %vm245, %v237, %v242
    %v247 = vrsqrt.pop %v216
    %v248 = vmul.f32 %v247, %v216
    %v249 = vmul.f32 %v248, %v247
    %v250 = vmul.f32 0.5, %v249
    %v251 = vsub.f32 1.5, %v250
    %v252 = vmul.f32 %v247, %v251
    %vm253 = vweird.f32 %v216
    %vm254 = vweird.f32 %v247
    %vm255 = vmor %vm253, %vm254
    %v256 = vsel %vm255, %v247, %v252
    %vm257 = vcmp.gt.s32.totalorder %v189, 0
    %v258 = vsel %vm257, %v210, 0.0
    %v259 = vsel %vm257, %v212, 0.0
    %v260 = vsel %vm257, %v214, 0.0
    %v261 = vsel %vm257, %v216, 0.0
    %v262 = vperm.slane %v226, 0
    %v263 = vperm.slane %v236, 0
    %v264 = vperm.slane %v246, 0
    %v265 = vperm.slane %v256, 0
    %v266 = vmul.f32 %v258, %v262
    %v267 = vmul.f32 %v259, %v263
    %v268 = vmul.f32 %v260, %v264
    %v269 = vmul.f32 %v261, %v265
    %vm270 = vcmp.gt.s32.totalorder %v191, 0
    %v271 = vsel %vm270, %v210, 0.0
    %v272 = vsel %vm270, %v212, 0.0
    %v273 = vsel %vm270, %v214, 0.0
    %v274 = vsel %vm270, %v216, 0.0
    %276 = vset.pattern.permute.xlu0 0
    %277 = vperm.xlu0 %276, %v226
    %v278 = vpop.permute.xlu0 %277
    %281 = vset.pattern.permute.xlu0 0
    %282 = vperm.xlu0 %281, %v236
    %v283 = vpop.permute.xlu0 %282
    %286 = vset.pattern.permute.xlu0 0
    %287 = vperm.xlu0 %286, %v246
    %v288 = vpop.permute.xlu0 %287
    %291 = vset.pattern.permute.xlu0 0
    %292 = vperm.xlu0 %291, %v256
    %v293 = vpop.permute.xlu0 %292
    %v295 = vmul.f32 %v271, %v278
    %v296 = vmul.f32 %v272, %v283
    %v297 = vmul.f32 %v273, %v288
    %v298 = vmul.f32 %v274, %v293
    %300 = vset.pattern.permute.xlu0 0
    %301 = vperm.xlu0 %300, %v266
    %v302 = vpop.permute.xlu0 %301
    %305 = vset.pattern.permute.xlu0 0
    %306 = vperm.xlu0 %305, %v267
    %v307 = vpop.permute.xlu0 %306
    %310 = vset.pattern.permute.xlu0 0
    %311 = vperm.xlu0 %310, %v268
    %v312 = vpop.permute.xlu0 %311
    %315 = vset.pattern.permute.xlu0 0
    %316 = vperm.xlu0 %315, %v269
    %v317 = vpop.permute.xlu0 %316
    %v319 = vperm.slane %v295, 0
    %v320 = vperm.slane %v296, 0
    %v321 = vperm.slane %v297, 0
    %v322 = vperm.slane %v298, 0
    %v323 = vmul.f32 %v302, %v319
    %v324 = vmul.f32 %v307, %v320
    %v325 = vmul.f32 %v312, %v321
    %v326 = vmul.f32 %v317, %v322
    %v327 = vsub.f32 %v210, %v323
    %v328 = vsub.f32 %v212, %v324
    %v329 = vsub.f32 %v214, %v325
    %v330 = vsub.f32 %v216, %v326
    %v331 = vlog2.pop %v210
    %v332 = vmul.f32 %v331, 0.6931472
    %v333 = vlog2.pop %v212
    %v334 = vmul.f32 %v333, 0.6931472
    %v335 = vlog2.pop %v214
    %v336 = vmul.f32 %v335, 0.6931472
    %v337 = vlog2.pop %v216
    %v338 = vmul.f32 %v337, 0.6931472
    %v339 = vrcp.pop 0.6931472
    %v340 = vmul.f32 0.6931472, %v339
    %v341 = vsub.f32 1.0, %v340
    %v342 = vmul.f32 %v339, %v341
    %v343 = vadd.f32 %v339, %v342
    %vm344 = vweird.f32 %v339
    %v345 = vsel %vm344, %v339, %v343
    %v346 = vmul.f32 %v332, %v345
    %v347 = vmul.f32 %v334, %v345
    %v348 = vmul.f32 %v336, %v345
    %v349 = vmul.f32 %v338, %v345
    %v350 = vadd.f32 %v346, 0.0
    %v351 = vadd.f32 %v347, 0.0
    %v352 = vadd.f32 %v348, 0.0
    %v353 = vadd.f32 %v349, 0.0
    %v354 = vrsqrt.pop %v327
    %v355 = vmul.f32 %v354, %v327
    %v356 = vmul.f32 %v355, %v354
    %v357 = vmul.f32 0.5, %v356
    %v358 = vsub.f32 1.5, %v357
    %v359 = vmul.f32 %v354, %v358
    %vm360 = vweird.f32 %v327
    %vm361 = vweird.f32 %v354
    %vm362 = vmor %vm360, %vm361
    %v363 = vsel %vm362, %v354, %v359
    %v364 = vrsqrt.pop %v328
    %v365 = vmul.f32 %v364, %v328
    %v366 = vmul.f32 %v365, %v364
    %v367 = vmul.f32 0.5, %v366
    %v368 = vsub.f32 1.5, %v367
    %v369 = vmul.f32 %v364, %v368
    %vm370 = vweird.f32 %v328
    %vm371 = vweird.f32 %v364
    %vm372 = vmor %vm370, %vm371
    %v373 = vsel %vm372, %v364, %v369
    %v374 = vrsqrt.pop %v329
    %v375 = vmul.f32 %v374, %v329
    %v376 = vmul.f32 %v375, %v374
    %v377 = vmul.f32 0.5, %v376
    %v378 = vsub.f32 1.5, %v377
    %v379 = vmul.f32 %v374, %v378
    %vm380 = vweird.f32 %v329
    %vm381 = vweird.f32 %v374
    %vm382 = vmor %vm380, %vm381
    %v383 = vsel %vm382, %v374, %v379
    %v384 = vrsqrt.pop %v330
    %v385 = vmul.f32 %v384, %v330
    %v386 = vmul.f32 %v385, %v384
    %v387 = vmul.f32 0.5, %v386
    %v388 = vsub.f32 1.5, %v387
    %v389 = vmul.f32 %v384, %v388
    %vm390 = vweird.f32 %v330
    %vm391 = vweird.f32 %v384
    %vm392 = vmor %vm390, %vm391
    %v393 = vsel %vm392, %v384, %v389
    %vm394 = vcmp.gt.s32.totalorder %v189, 1
    %v395 = vsel %vm394, %v327, 0.0
    %v396 = vsel %vm394, %v328, 0.0
    %v397 = vsel %vm394, %v329, 0.0
    %v398 = vsel %vm394, %v330, 0.0
    %v399 = vperm.slane %v363, 1
    %v400 = vperm.slane %v373, 1
    %v401 = vperm.slane %v383, 1
    %v402 = vperm.slane %v393, 1
    %v403 = vmul.f32 %v395, %v399
    %v404 = vmul.f32 %v396, %v400
    %v405 = vmul.f32 %v397, %v401
    %v406 = vmul.f32 %v398, %v402
    %vm407 = vcmp.gt.s32.totalorder %v191, 1
    %v408 = vsel %vm407, %v327, 0.0
    %v409 = vsel %vm407, %v328, 0.0
    %v410 = vsel %vm407, %v329, 0.0
    %v411 = vsel %vm407, %v330, 0.0
    %413 = vset.pattern.permute.xlu0 1
    %414 = vperm.xlu0 %413, %v363
    %v415 = vpop.permute.xlu0 %414
    %418 = vset.pattern.permute.xlu0 1
    %419 = vperm.xlu0 %418, %v373
    %v420 = vpop.permute.xlu0 %419
    %423 = vset.pattern.permute.xlu0 1
    %424 = vperm.xlu0 %423, %v383
    %v425 = vpop.permute.xlu0 %424
    %428 = vset.pattern.permute.xlu0 1
    %429 = vperm.xlu0 %428, %v393
    %v430 = vpop.permute.xlu0 %429
    %v432 = vmul.f32 %v408, %v415
    %v433 = vmul.f32 %v409, %v420
    %v434 = vmul.f32 %v410, %v425
    %v435 = vmul.f32 %v411, %v430
    %437 = vset.pattern.permute.xlu0 1
    %438 = vperm.xlu0 %437, %v403
    %v439 = vpop.permute.xlu0 %438
    %442 = vset.pattern.permute.xlu0 1
    %443 = vperm.xlu0 %442, %v404
    %v444 = vpop.permute.xlu0 %443
    %447 = vset.pattern.permute.xlu0 1
    %448 = vperm.xlu0 %447, %v405
    %v449 = vpop.permute.xlu0 %448
    %452 = vset.pattern.permute.xlu0 1
    %453 = vperm.xlu0 %452, %v406
    %v454 = vpop.permute.xlu0 %453
    %v456 = vperm.slane %v432, 1
    %v457 = vperm.slane %v433, 1
    %v458 = vperm.slane %v434, 1
    %v459 = vperm.slane %v435, 1
    %v460 = vmul.f32 %v439, %v456
    %v461 = vmul.f32 %v444, %v457
    %v462 = vmul.f32 %v449, %v458
    %v463 = vmul.f32 %v454, %v459
    %v464 = vsub.f32 %v327, %v460
    %v465 = vsub.f32 %v328, %v461
    %v466 = vsub.f32 %v329, %v462
    %v467 = vsub.f32 %v330, %v463
    %v468 = vlog2.pop %v327
    %v469 = vmul.f32 %v468, 0.6931472
    %v470 = vlog2.pop %v328
    %v471 = vmul.f32 %v470, 0.6931472
    %v472 = vlog2.pop %v329
    %v473 = vmul.f32 %v472, 0.6931472
    %v474 = vlog2.pop %v330
    %v475 = vmul.f32 %v474, 0.6931472
    %v476 = vmul.f32 %v469, %v345
    %v477 = vmul.f32 %v471, %v345
    %v478 = vmul.f32 %v473, %v345
    %v479 = vmul.f32 %v475, %v345
    %v484 = vrot.slane %v476, 1
    %v485 = vrot.slane %v477, 1
    %v486 = vrot.slane %v478, 1
    %v487 = vrot.slane %v479, 1
    %488 = vrot.lane.b32.xlu0 %v484, 127
    %v489 = vpop.permute.xlu0 %488
    %490 = vrot.lane.b32.xlu0 %v485, 127
    %v491 = vpop.permute.xlu0 %490
    %492 = vrot.lane.b32.xlu0 %v486, 127
    %v493 = vpop.permute.xlu0 %492
    %494 = vrot.lane.b32.xlu0 %v487, 127
    %v495 = vpop.permute.xlu0 %494
    %v500 = vadd.f32 %v350, %v489
    %v501 = vadd.f32 %v351, %v491
    %v502 = vadd.f32 %v352, %v493
    %v503 = vadd.f32 %v353, %v495
    %v504 = vrsqrt.pop %v464
    %v505 = vmul.f32 %v504, %v464
    %v506 = vmul.f32 %v505, %v504
    %v507 = vmul.f32 0.5, %v506
    %v508 = vsub.f32 1.5, %v507
    %v509 = vmul.f32 %v504, %v508
    %vm510 = vweird.f32 %v464
    %vm511 = vweird.f32 %v504
    %vm512 = vmor %vm510, %vm511
    %v513 = vsel %vm512, %v504, %v509
    %v514 = vrsqrt.pop %v465
    %v515 = vmul.f32 %v514, %v465
    %v516 = vmul.f32 %v515, %v514
    %v517 = vmul.f32 0.5, %v516
    %v518 = vsub.f32 1.5, %v517
    %v519 = vmul.f32 %v514, %v518
    %vm520 = vweird.f32 %v465
    %vm521 = vweird.f32 %v514
    %vm522 = vmor %vm520, %vm521
    %v523 = vsel %vm522, %v514, %v519
    %v524 = vrsqrt.pop %v466
    %v525 = vmul.f32 %v524, %v466
    %v526 = vmul.f32 %v525, %v524
    %v527 = vmul.f32 0.5, %v526
    %v528 = vsub.f32 1.5, %v527
    %v529 = vmul.f32 %v524, %v528
    %vm530 = vweird.f32 %v466
    %vm531 = vweird.f32 %v524
    %vm532 = vmor %vm530, %vm531
    %v533 = vsel %vm532, %v524, %v529
    %v534 = vrsqrt.pop %v467
    %v535 = vmul.f32 %v534, %v467
    %v536 = vmul.f32 %v535, %v534
    %v537 = vmul.f32 0.5, %v536
    %v538 = vsub.f32 1.5, %v537
    %v539 = vmul.f32 %v534, %v538
    %vm540 = vweird.f32 %v467
    %vm541 = vweird.f32 %v534
    %vm542 = vmor %vm540, %vm541
    %v543 = vsel %vm542, %v534, %v539
    %vm544 = vcmp.gt.s32.totalorder %v189, 2
    %v545 = vsel %vm544, %v464, 0.0
    %v546 = vsel %vm544, %v465, 0.0
    %v547 = vsel %vm544, %v466, 0.0
    %v548 = vsel %vm544, %v467, 0.0
    %v549 = vperm.slane %v513, 2
    %v550 = vperm.slane %v523, 2
    %v551 = vperm.slane %v533, 2
    %v552 = vperm.slane %v543, 2
    %v553 = vmul.f32 %v545, %v549
    %v554 = vmul.f32 %v546, %v550
    %v555 = vmul.f32 %v547, %v551
    %v556 = vmul.f32 %v548, %v552
    %vm557 = vcmp.gt.s32.totalorder %v191, 2
    %v558 = vsel %vm557, %v464, 0.0
    %v559 = vsel %vm557, %v465, 0.0
    %v560 = vsel %vm557, %v466, 0.0
    %v561 = vsel %vm557, %v467, 0.0
    %563 = vset.pattern.permute.xlu0 2
    %564 = vperm.xlu0 %563, %v513
    %v565 = vpop.permute.xlu0 %564
    %568 = vset.pattern.permute.xlu0 2
    %569 = vperm.xlu0 %568, %v523
    %v570 = vpop.permute.xlu0 %569
    %573 = vset.pattern.permute.xlu0 2
    %574 = vperm.xlu0 %573, %v533
    %v575 = vpop.permute.xlu0 %574
    %578 = vset.pattern.permute.xlu0 2
    %579 = vperm.xlu0 %578, %v543
    %v580 = vpop.permute.xlu0 %579
    %v582 = vmul.f32 %v558, %v565
    %v583 = vmul.f32 %v559, %v570
    %v584 = vmul.f32 %v560, %v575
    %v585 = vmul.f32 %v561, %v580
    %587 = vset.pattern.permute.xlu0 2
    %588 = vperm.xlu0 %587, %v553
    %v589 = vpop.permute.xlu0 %588
    %592 = vset.pattern.permute.xlu0 2
    %593 = vperm.xlu0 %592, %v554
    %v594 = vpop.permute.xlu0 %593
    %597 = vset.pattern.permute.xlu0 2
    %598 = vperm.xlu0 %597, %v555
    %v599 = vpop.permute.xlu0 %598
    %602 = vset.pattern.permute.xlu0 2
    %603 = vperm.xlu0 %602, %v556
    %v604 = vpop.permute.xlu0 %603
    %v606 = vperm.slane %v582, 2
    %v607 = vperm.slane %v583, 2
    %v608 = vperm.slane %v584, 2
    %v609 = vperm.slane %v585, 2
    %v610 = vmul.f32 %v589, %v606
    %v611 = vmul.f32 %v594, %v607
    %v612 = vmul.f32 %v599, %v608
    %v613 = vmul.f32 %v604, %v609
    %v614 = vsub.f32 %v464, %v610
    %v615 = vsub.f32 %v465, %v611
    %v616 = vsub.f32 %v466, %v612
    %v617 = vsub.f32 %v467, %v613
    %v618 = vlog2.pop %v464
    %v619 = vmul.f32 %v618, 0.6931472
    %v620 = vlog2.pop %v465
    %v621 = vmul.f32 %v620, 0.6931472
    %v622 = vlog2.pop %v466
    %v623 = vmul.f32 %v622, 0.6931472
    %v624 = vlog2.pop %v467
    %v625 = vmul.f32 %v624, 0.6931472
    %v626 = vmul.f32 %v619, %v345
    %v627 = vmul.f32 %v621, %v345
    %v628 = vmul.f32 %v623, %v345
    %v629 = vmul.f32 %v625, %v345
    %v634 = vrot.slane %v626, 2
    %v635 = vrot.slane %v627, 2
    %v636 = vrot.slane %v628, 2
    %v637 = vrot.slane %v629, 2
    %638 = vrot.lane.b32.xlu0 %v634, 126
    %v639 = vpop.permute.xlu0 %638
    %640 = vrot.lane.b32.xlu0 %v635, 126
    %v641 = vpop.permute.xlu0 %640
    %642 = vrot.lane.b32.xlu0 %v636, 126
    %v643 = vpop.permute.xlu0 %642
    %644 = vrot.lane.b32.xlu0 %v637, 126
    %v645 = vpop.permute.xlu0 %644
    %v650 = vadd.f32 %v500, %v639
    %v651 = vadd.f32 %v501, %v641
    %v652 = vadd.f32 %v502, %v643
    %v653 = vadd.f32 %v503, %v645
    %v654 = vrsqrt.pop %v614
    %v655 = vmul.f32 %v654, %v614
    %v656 = vmul.f32 %v655, %v654
    %v657 = vmul.f32 0.5, %v656
    %v658 = vsub.f32 1.5, %v657
    %v659 = vmul.f32 %v654, %v658
    %vm660 = vweird.f32 %v614
    %vm661 = vweird.f32 %v654
    %vm662 = vmor %vm660, %vm661
    %v663 = vsel %vm662, %v654, %v659
    %v664 = vrsqrt.pop %v615
    %v665 = vmul.f32 %v664, %v615
    %v666 = vmul.f32 %v665, %v664
    %v667 = vmul.f32 0.5, %v666
    %v668 = vsub.f32 1.5, %v667
    %v669 = vmul.f32 %v664, %v668
    %vm670 = vweird.f32 %v615
    %vm671 = vweird.f32 %v664
    %vm672 = vmor %vm670, %vm671
    %v673 = vsel %vm672, %v664, %v669
    %v674 = vrsqrt.pop %v616
    %v675 = vmul.f32 %v674, %v616
    %v676 = vmul.f32 %v675, %v674
    %v677 = vmul.f32 0.5, %v676
    %v678 = vsub.f32 1.5, %v677
    %v679 = vmul.f32 %v674, %v678
    %vm680 = vweird.f32 %v616
    %vm681 = vweird.f32 %v674
    %vm682 = vmor %vm680, %vm681
    %v683 = vsel %vm682, %v674, %v679
    %v684 = vrsqrt.pop %v617
    %v685 = vmul.f32 %v684, %v617
    %v686 = vmul.f32 %v685, %v684
    %v687 = vmul.f32 0.5, %v686
    %v688 = vsub.f32 1.5, %v687
    %v689 = vmul.f32 %v684, %v688
    %vm690 = vweird.f32 %v617
    %vm691 = vweird.f32 %v684
    %vm692 = vmor %vm690, %vm691
    %v693 = vsel %vm692, %v684, %v689
    %vm694 = vcmp.gt.s32.totalorder %v189, 3
    %v695 = vsel %vm694, %v614, 0.0
    %v696 = vsel %vm694, %v615, 0.0
    %v697 = vsel %vm694, %v616, 0.0
    %v698 = vsel %vm694, %v617, 0.0
    %v699 = vperm.slane %v663, 3
    %v700 = vperm.slane %v673, 3
    %v701 = vperm.slane %v683, 3
    %v702 = vperm.slane %v693, 3
    %v703 = vmul.f32 %v695, %v699
    %v704 = vmul.f32 %v696, %v700
    %v705 = vmul.f32 %v697, %v701
    %v706 = vmul.f32 %v698, %v702
    %vm707 = vcmp.gt.s32.totalorder %v191, 3
    %v708 = vsel %vm707, %v614, 0.0
    %v709 = vsel %vm707, %v615, 0.0
    %v710 = vsel %vm707, %v616, 0.0
    %v711 = vsel %vm707, %v617, 0.0
    %713 = vset.pattern.permute.xlu0 3
    %714 = vperm.xlu0 %713, %v663
    %v715 = vpop.permute.xlu0 %714
    %718 = vset.pattern.permute.xlu0 3
    %719 = vperm.xlu0 %718, %v673
    %v720 = vpop.permute.xlu0 %719
    %723 = vset.pattern.permute.xlu0 3
    %724 = vperm.xlu0 %723, %v683
    %v725 = vpop.permute.xlu0 %724
    %728 = vset.pattern.permute.xlu0 3
    %729 = vperm.xlu0 %728, %v693
    %v730 = vpop.permute.xlu0 %729
    %v732 = vmul.f32 %v708, %v715
    %v733 = vmul.f32 %v709, %v720
    %v734 = vmul.f32 %v710, %v725
    %v735 = vmul.f32 %v711, %v730
    %737 = vset.pattern.permute.xlu0 3
    %738 = vperm.xlu0 %737, %v703
    %v739 = vpop.permute.xlu0 %738
    %742 = vset.pattern.permute.xlu0 3
    %743 = vperm.xlu0 %742, %v704
    %v744 = vpop.permute.xlu0 %743
    %747 = vset.pattern.permute.xlu0 3
    %748 = vperm.xlu0 %747, %v705
    %v749 = vpop.permute.xlu0 %748
    %752 = vset.pattern.permute.xlu0 3
    %753 = vperm.xlu0 %752, %v706
    %v754 = vpop.permute.xlu0 %753
    %v756 = vperm.slane %v732, 3
    %v757 = vperm.slane %v733, 3
    %v758 = vperm.slane %v734, 3
    %v759 = vperm.slane %v735, 3
    %v760 = vmul.f32 %v739, %v756
    %v761 = vmul.f32 %v744, %v757
    %v762 = vmul.f32 %v749, %v758
    %v763 = vmul.f32 %v754, %v759
    %v764 = vsub.f32 %v614, %v760
    %v765 = vsub.f32 %v615, %v761
    %v766 = vsub.f32 %v616, %v762
    %v767 = vsub.f32 %v617, %v763
    %v768 = vlog2.pop %v614
    %v769 = vmul.f32 %v768, 0.6931472
    %v770 = vlog2.pop %v615
    %v771 = vmul.f32 %v770, 0.6931472
    %v772 = vlog2.pop %v616
    %v773 = vmul.f32 %v772, 0.6931472
    %v774 = vlog2.pop %v617
    %v775 = vmul.f32 %v774, 0.6931472
    %v776 = vmul.f32 %v769, %v345
    %v777 = vmul.f32 %v771, %v345
    %v778 = vmul.f32 %v773, %v345
    %v779 = vmul.f32 %v775, %v345
    %v784 = vrot.slane %v776, 3
    %v785 = vrot.slane %v777, 3
    %v786 = vrot.slane %v778, 3
    %v787 = vrot.slane %v779, 3
    %788 = vrot.lane.b32.xlu0 %v784, 125
    %v789 = vpop.permute.xlu0 %788
    %790 = vrot.lane.b32.xlu0 %v785, 125
    %v791 = vpop.permute.xlu0 %790
    %792 = vrot.lane.b32.xlu0 %v786, 125
    %v793 = vpop.permute.xlu0 %792
    %794 = vrot.lane.b32.xlu0 %v787, 125
    %v795 = vpop.permute.xlu0 %794
    %v800 = vadd.f32 %v650, %v789
    %v801 = vadd.f32 %v651, %v791
    %v802 = vadd.f32 %v652, %v793
    %v803 = vadd.f32 %v653, %v795
    %v804 = vrsqrt.pop %v764
    %v805 = vmul.f32 %v804, %v764
    %v806 = vmul.f32 %v805, %v804
    %v807 = vmul.f32 0.5, %v806
    %v808 = vsub.f32 1.5, %v807
    %v809 = vmul.f32 %v804, %v808
    %vm810 = vweird.f32 %v764
    %vm811 = vweird.f32 %v804
    %vm812 = vmor %vm810, %vm811
    %v813 = vsel %vm812, %v804, %v809
    %v814 = vrsqrt.pop %v765
    %v815 = vmul.f32 %v814, %v765
    %v816 = vmul.f32 %v815, %v814
    %v817 = vmul.f32 0.5, %v816
    %v818 = vsub.f32 1.5, %v817
    %v819 = vmul.f32 %v814, %v818
    %vm820 = vweird.f32 %v765
    %vm821 = vweird.f32 %v814
    %vm822 = vmor %vm820, %vm821
    %v823 = vsel %vm822, %v814, %v819
    %v824 = vrsqrt.pop %v766
    %v825 = vmul.f32 %v824, %v766
    %v826 = vmul.f32 %v825, %v824
    %v827 = vmul.f32 0.5, %v826
    %v828 = vsub.f32 1.5, %v827
    %v829 = vmul.f32 %v824, %v828
    %vm830 = vweird.f32 %v766
    %vm831 = vweird.f32 %v824
    %vm832 = vmor %vm830, %vm831
    %v833 = vsel %vm832, %v824, %v829
    %v834 = vrsqrt.pop %v767
    %v835 = vmul.f32 %v834, %v767
    %v836 = vmul.f32 %v835, %v834
    %v837 = vmul.f32 0.5, %v836
    %v838 = vsub.f32 1.5, %v837
    %v839 = vmul.f32 %v834, %v838
    %vm840 = vweird.f32 %v767
    %vm841 = vweird.f32 %v834
    %vm842 = vmor %vm840, %vm841
    %v843 = vsel %vm842, %v834, %v839
    %vm844 = vcmp.gt.s32.totalorder %v189, 4
    %v845 = vsel %vm844, %v764, 0.0
    %v846 = vsel %vm844, %v765, 0.0
    %v847 = vsel %vm844, %v766, 0.0
    %v848 = vsel %vm844, %v767, 0.0
    %v849 = vperm.slane %v813, 4
    %v850 = vperm.slane %v823, 4
    %v851 = vperm.slane %v833, 4
    %v852 = vperm.slane %v843, 4
    %v853 = vmul.f32 %v845, %v849
    %v854 = vmul.f32 %v846, %v850
    %v855 = vmul.f32 %v847, %v851
    %v856 = vmul.f32 %v848, %v852
    %vm857 = vcmp.gt.s32.totalorder %v191, 4
    %v858 = vsel %vm857, %v764, 0.0
    %v859 = vsel %vm857, %v765, 0.0
    %v860 = vsel %vm857, %v766, 0.0
    %v861 = vsel %vm857, %v767, 0.0
    %863 = vset.pattern.permute.xlu0 4
    %864 = vperm.xlu0 %863, %v813
    %v865 = vpop.permute.xlu0 %864
    %868 = vset.pattern.permute.xlu0 4
    %869 = vperm.xlu0 %868, %v823
    %v870 = vpop.permute.xlu0 %869
    %873 = vset.pattern.permute.xlu0 4
    %874 = vperm.xlu0 %873, %v833
    %v875 = vpop.permute.xlu0 %874
    %878 = vset.pattern.permute.xlu0 4
    %879 = vperm.xlu0 %878, %v843
    %v880 = vpop.permute.xlu0 %879
    %v882 = vmul.f32 %v858, %v865
    %v883 = vmul.f32 %v859, %v870
    %v884 = vmul.f32 %v860, %v875
    %v885 = vmul.f32 %v861, %v880
    %887 = vset.pattern.permute.xlu0 4
    %888 = vperm.xlu0 %887, %v853
    %v889 = vpop.permute.xlu0 %888
    %892 = vset.pattern.permute.xlu0 4
    %893 = vperm.xlu0 %892, %v854
    %v894 = vpop.permute.xlu0 %893
    %897 = vset.pattern.permute.xlu0 4
    %898 = vperm.xlu0 %897, %v855
    %v899 = vpop.permute.xlu0 %898
    %902 = vset.pattern.permute.xlu0 4
    %903 = vperm.xlu0 %902, %v856
    %v904 = vpop.permute.xlu0 %903
    %v906 = vperm.slane %v882, 4
    %v907 = vperm.slane %v883, 4
    %v908 = vperm.slane %v884, 4
    %v909 = vperm.slane %v885, 4
    %v910 = vmul.f32 %v889, %v906
    %v911 = vmul.f32 %v894, %v907
    %v912 = vmul.f32 %v899, %v908
    %v913 = vmul.f32 %v904, %v909
    %v914 = vsub.f32 %v764, %v910
    %v915 = vsub.f32 %v765, %v911
    %v916 = vsub.f32 %v766, %v912
    %v917 = vsub.f32 %v767, %v913
    %v918 = vlog2.pop %v764
    %v919 = vmul.f32 %v918, 0.6931472
    %v920 = vlog2.pop %v765
    %v921 = vmul.f32 %v920, 0.6931472
    %v922 = vlog2.pop %v766
    %v923 = vmul.f32 %v922, 0.6931472
    %v924 = vlog2.pop %v767
    %v925 = vmul.f32 %v924, 0.6931472
    %v926 = vmul.f32 %v919, %v345
    %v927 = vmul.f32 %v921, %v345
    %v928 = vmul.f32 %v923, %v345
    %v929 = vmul.f32 %v925, %v345
    %v934 = vrot.slane %v926, 4
    %v935 = vrot.slane %v927, 4
    %v936 = vrot.slane %v928, 4
    %v937 = vrot.slane %v929, 4
    %938 = vrot.lane.b32.xlu0 %v934, 124
    %v939 = vpop.permute.xlu0 %938
    %940 = vrot.lane.b32.xlu0 %v935, 124
    %v941 = vpop.permute.xlu0 %940
    %942 = vrot.lane.b32.xlu0 %v936, 124
    %v943 = vpop.permute.xlu0 %942
    %944 = vrot.lane.b32.xlu0 %v937, 124
    %v945 = vpop.permute.xlu0 %944
    %v950 = vadd.f32 %v800, %v939
    %v951 = vadd.f32 %v801, %v941
    %v952 = vadd.f32 %v802, %v943
    %v953 = vadd.f32 %v803, %v945
    %v954 = vrsqrt.pop %v914
    %v955 = vmul.f32 %v954, %v914
    %v956 = vmul.f32 %v955, %v954
    %v957 = vmul.f32 0.5, %v956
    %v958 = vsub.f32 1.5, %v957
    %v959 = vmul.f32 %v954, %v958
    %vm960 = vweird.f32 %v914
    %vm961 = vweird.f32 %v954
    %vm962 = vmor %vm960, %vm961
    %v963 = vsel %vm962, %v954, %v959
    %v964 = vrsqrt.pop %v915
    %v965 = vmul.f32 %v964, %v915
    %v966 = vmul.f32 %v965, %v964
    %v967 = vmul.f32 0.5, %v966
    %v968 = vsub.f32 1.5, %v967
    %v969 = vmul.f32 %v964, %v968
    %vm970 = vweird.f32 %v915
    %vm971 = vweird.f32 %v964
    %vm972 = vmor %vm970, %vm971
    %v973 = vsel %vm972, %v964, %v969
    %v974 = vrsqrt.pop %v916
    %v975 = vmul.f32 %v974, %v916
    %v976 = vmul.f32 %v975, %v974
    %v977 = vmul.f32 0.5, %v976
    %v978 = vsub.f32 1.5, %v977
    %v979 = vmul.f32 %v974, %v978
    %vm980 = vweird.f32 %v916
    %vm981 = vweird.f32 %v974
    %vm982 = vmor %vm980, %vm981
    %v983 = vsel %vm982, %v974, %v979
    %v984 = vrsqrt.pop %v917
    %v985 = vmul.f32 %v984, %v917
    %v986 = vmul.f32 %v985, %v984
    %v987 = vmul.f32 0.5, %v986
    %v988 = vsub.f32 1.5, %v987
    %v989 = vmul.f32 %v984, %v988
    %vm990 = vweird.f32 %v917
    %vm991 = vweird.f32 %v984
    %vm992 = vmor %vm990, %vm991
    %v993 = vsel %vm992, %v984, %v989
    %vm994 = vcmp.gt.s32.totalorder %v189, 5
    %v995 = vsel %vm994, %v914, 0.0
    %v996 = vsel %vm994, %v915, 0.0
    %v997 = vsel %vm994, %v916, 0.0
    %v998 = vsel %vm994, %v917, 0.0
    %v999 = vperm.slane %v963, 5
    %v1000 = vperm.slane %v973, 5
    %v1001 = vperm.slane %v983, 5
    %v1002 = vperm.slane %v993, 5
    %v1003 = vmul.f32 %v995, %v999
    %v1004 = vmul.f32 %v996, %v1000
    %v1005 = vmul.f32 %v997, %v1001
    %v1006 = vmul.f32 %v998, %v1002
    %vm1007 = vcmp.gt.s32.totalorder %v191, 5
    %v1008 = vsel %vm1007, %v914, 0.0
    %v1009 = vsel %vm1007, %v915, 0.0
    %v1010 = vsel %vm1007, %v916, 0.0
    %v1011 = vsel %vm1007, %v917, 0.0
    %1013 = vset.pattern.permute.xlu0 5
    %1014 = vperm.xlu0 %1013, %v963
    %v1015 = vpop.permute.xlu0 %1014
    %1018 = vset.pattern.permute.xlu0 5
    %1019 = vperm.xlu0 %1018, %v973
    %v1020 = vpop.permute.xlu0 %1019
    %1023 = vset.pattern.permute.xlu0 5
    %1024 = vperm.xlu0 %1023, %v983
    %v1025 = vpop.permute.xlu0 %1024
    %1028 = vset.pattern.permute.xlu0 5
    %1029 = vperm.xlu0 %1028, %v993
    %v1030 = vpop.permute.xlu0 %1029
    %v1032 = vmul.f32 %v1008, %v1015
    %v1033 = vmul.f32 %v1009, %v1020
    %v1034 = vmul.f32 %v1010, %v1025
    %v1035 = vmul.f32 %v1011, %v1030
    %1037 = vset.pattern.permute.xlu0 5
    %1038 = vperm.xlu0 %1037, %v1003
    %v1039 = vpop.permute.xlu0 %1038
    %1042 = vset.pattern.permute.xlu0 5
    %1043 = vperm.xlu0 %1042, %v1004
    %v1044 = vpop.permute.xlu0 %1043
    %1047 = vset.pattern.permute.xlu0 5
    %1048 = vperm.xlu0 %1047, %v1005
    %v1049 = vpop.permute.xlu0 %1048
    %1052 = vset.pattern.permute.xlu0 5
    %1053 = vperm.xlu0 %1052, %v1006
    %v1054 = vpop.permute.xlu0 %1053
    %v1056 = vperm.slane %v1032, 5
    %v1057 = vperm.slane %v1033, 5
    %v1058 = vperm.slane %v1034, 5
    %v1059 = vperm.slane %v1035, 5
    %v1060 = vmul.f32 %v1039, %v1056
    %v1061 = vmul.f32 %v1044, %v1057
    %v1062 = vmul.f32 %v1049, %v1058
    %v1063 = vmul.f32 %v1054, %v1059
    %v1064 = vsub.f32 %v914, %v1060
    %v1065 = vsub.f32 %v915, %v1061
    %v1066 = vsub.f32 %v916, %v1062
    %v1067 = vsub.f32 %v917, %v1063
    %v1068 = vlog2.pop %v914
    %v1069 = vmul.f32 %v1068, 0.6931472
    %v1070 = vlog2.pop %v915
    %v1071 = vmul.f32 %v1070, 0.6931472
    %v1072 = vlog2.pop %v916
    %v1073 = vmul.f32 %v1072, 0.6931472
    %v1074 = vlog2.pop %v917
    %v1075 = vmul.f32 %v1074, 0.6931472
    %v1076 = vmul.f32 %v1069, %v345
    %v1077 = vmul.f32 %v1071, %v345
    %v1078 = vmul.f32 %v1073, %v345
    %v1079 = vmul.f32 %v1075, %v345
    %v1084 = vrot.slane %v1076, 5
    %v1085 = vrot.slane %v1077, 5
    %v1086 = vrot.slane %v1078, 5
    %v1087 = vrot.slane %v1079, 5
    %1088 = vrot.lane.b32.xlu0 %v1084, 123
    %v1089 = vpop.permute.xlu0 %1088
    %1090 = vrot.lane.b32.xlu0 %v1085, 123
    %v1091 = vpop.permute.xlu0 %1090
    %1092 = vrot.lane.b32.xlu0 %v1086, 123
    %v1093 = vpop.permute.xlu0 %1092
    %1094 = vrot.lane.b32.xlu0 %v1087, 123
    %v1095 = vpop.permute.xlu0 %1094
    %v1100 = vadd.f32 %v950, %v1089
    %v1101 = vadd.f32 %v951, %v1091
    %v1102 = vadd.f32 %v952, %v1093
    %v1103 = vadd.f32 %v953, %v1095
    %v1104 = vrsqrt.pop %v1064
    %v1105 = vmul.f32 %v1104, %v1064
    %v1106 = vmul.f32 %v1105, %v1104
    %v1107 = vmul.f32 0.5, %v1106
    %v1108 = vsub.f32 1.5, %v1107
    %v1109 = vmul.f32 %v1104, %v1108
    %vm1110 = vweird.f32 %v1064
    %vm1111 = vweird.f32 %v1104
    %vm1112 = vmor %vm1110, %vm1111
    %v1113 = vsel %vm1112, %v1104, %v1109
    %v1114 = vrsqrt.pop %v1065
    %v1115 = vmul.f32 %v1114, %v1065
    %v1116 = vmul.f32 %v1115, %v1114
    %v1117 = vmul.f32 0.5, %v1116
    %v1118 = vsub.f32 1.5, %v1117
    %v1119 = vmul.f32 %v1114, %v1118
    %vm1120 = vweird.f32 %v1065
    %vm1121 = vweird.f32 %v1114
    %vm1122 = vmor %vm1120, %vm1121
    %v1123 = vsel %vm1122, %v1114, %v1119
    %v1124 = vrsqrt.pop %v1066
    %v1125 = vmul.f32 %v1124, %v1066
    %v1126 = vmul.f32 %v1125, %v1124
    %v1127 = vmul.f32 0.5, %v1126
    %v1128 = vsub.f32 1.5, %v1127
    %v1129 = vmul.f32 %v1124, %v1128
    %vm1130 = vweird.f32 %v1066
    %vm1131 = vweird.f32 %v1124
    %vm1132 = vmor %vm1130, %vm1131
    %v1133 = vsel %vm1132, %v1124, %v1129
    %v1134 = vrsqrt.pop %v1067
    %v1135 = vmul.f32 %v1134, %v1067
    %v1136 = vmul.f32 %v1135, %v1134
    %v1137 = vmul.f32 0.5, %v1136
    %v1138 = vsub.f32 1.5, %v1137
    %v1139 = vmul.f32 %v1134, %v1138
    %vm1140 = vweird.f32 %v1067
    %vm1141 = vweird.f32 %v1134
    %vm1142 = vmor %vm1140, %vm1141
    %v1143 = vsel %vm1142, %v1134, %v1139
    %vm1144 = vcmp.gt.s32.totalorder %v189, 6
    %v1145 = vsel %vm1144, %v1064, 0.0
    %v1146 = vsel %vm1144, %v1065, 0.0
    %v1147 = vsel %vm1144, %v1066, 0.0
    %v1148 = vsel %vm1144, %v1067, 0.0
    %v1149 = vperm.slane %v1113, 6
    %v1150 = vperm.slane %v1123, 6
    %v1151 = vperm.slane %v1133, 6
    %v1152 = vperm.slane %v1143, 6
    %v1153 = vmul.f32 %v1145, %v1149
    %v1154 = vmul.f32 %v1146, %v1150
    %v1155 = vmul.f32 %v1147, %v1151
    %v1156 = vmul.f32 %v1148, %v1152
    %vm1157 = vcmp.gt.s32.totalorder %v191, 6
    %v1158 = vsel %vm1157, %v1064, 0.0
    %v1159 = vsel %vm1157, %v1065, 0.0
    %v1160 = vsel %vm1157, %v1066, 0.0
    %v1161 = vsel %vm1157, %v1067, 0.0
    %1163 = vset.pattern.permute.xlu0 6
    %1164 = vperm.xlu0 %1163, %v1113
    %v1165 = vpop.permute.xlu0 %1164
    %1168 = vset.pattern.permute.xlu0 6
    %1169 = vperm.xlu0 %1168, %v1123
    %v1170 = vpop.permute.xlu0 %1169
    %1173 = vset.pattern.permute.xlu0 6
    %1174 = vperm.xlu0 %1173, %v1133
    %v1175 = vpop.permute.xlu0 %1174
    %1178 = vset.pattern.permute.xlu0 6
    %1179 = vperm.xlu0 %1178, %v1143
    %v1180 = vpop.permute.xlu0 %1179
    %v1182 = vmul.f32 %v1158, %v1165
    %v1183 = vmul.f32 %v1159, %v1170
    %v1184 = vmul.f32 %v1160, %v1175
    %v1185 = vmul.f32 %v1161, %v1180
    %1187 = vset.pattern.permute.xlu0 6
    %1188 = vperm.xlu0 %1187, %v1153
    %v1189 = vpop.permute.xlu0 %1188
    %1192 = vset.pattern.permute.xlu0 6
    %1193 = vperm.xlu0 %1192, %v1154
    %v1194 = vpop.permute.xlu0 %1193
    %1197 = vset.pattern.permute.xlu0 6
    %1198 = vperm.xlu0 %1197, %v1155
    %v1199 = vpop.permute.xlu0 %1198
    %1202 = vset.pattern.permute.xlu0 6
    %1203 = vperm.xlu0 %1202, %v1156
    %v1204 = vpop.permute.xlu0 %1203
    %v1206 = vperm.slane %v1182, 6
    %v1207 = vperm.slane %v1183, 6
    %v1208 = vperm.slane %v1184, 6
    %v1209 = vperm.slane %v1185, 6
    %v1210 = vmul.f32 %v1189, %v1206
    %v1211 = vmul.f32 %v1194, %v1207
    %v1212 = vmul.f32 %v1199, %v1208
    %v1213 = vmul.f32 %v1204, %v1209
    %v1214 = vsub.f32 %v1064, %v1210
    %v1215 = vsub.f32 %v1065, %v1211
    %v1216 = vsub.f32 %v1066, %v1212
    %v1217 = vsub.f32 %v1067, %v1213
    %v1218 = vlog2.pop %v1064
    %v1219 = vmul.f32 %v1218, 0.6931472
    %v1220 = vlog2.pop %v1065
    %v1221 = vmul.f32 %v1220, 0.6931472
    %v1222 = vlog2.pop %v1066
    %v1223 = vmul.f32 %v1222, 0.6931472
    %v1224 = vlog2.pop %v1067
    %v1225 = vmul.f32 %v1224, 0.6931472
    %v1226 = vmul.f32 %v1219, %v345
    %v1227 = vmul.f32 %v1221, %v345
    %v1228 = vmul.f32 %v1223, %v345
    %v1229 = vmul.f32 %v1225, %v345
    %v1234 = vrot.slane %v1226, 6
    %v1235 = vrot.slane %v1227, 6
    %v1236 = vrot.slane %v1228, 6
    %v1237 = vrot.slane %v1229, 6
    %1238 = vrot.lane.b32.xlu0 %v1234, 122
    %v1239 = vpop.permute.xlu0 %1238
    %1240 = vrot.lane.b32.xlu0 %v1235, 122
    %v1241 = vpop.permute.xlu0 %1240
    %1242 = vrot.lane.b32.xlu0 %v1236, 122
    %v1243 = vpop.permute.xlu0 %1242
    %1244 = vrot.lane.b32.xlu0 %v1237, 122
    %v1245 = vpop.permute.xlu0 %1244
    %v1250 = vadd.f32 %v1100, %v1239
    %v1251 = vadd.f32 %v1101, %v1241
    %v1252 = vadd.f32 %v1102, %v1243
    %v1253 = vadd.f32 %v1103, %v1245
    %v1254 = vlog2.pop %v1214
    %v1255 = vmul.f32 %v1254, 0.6931472
    %v1256 = vlog2.pop %v1215
    %v1257 = vmul.f32 %v1256, 0.6931472
    %v1258 = vlog2.pop %v1216
    %v1259 = vmul.f32 %v1258, 0.6931472
    %v1260 = vlog2.pop %v1217
    %v1261 = vmul.f32 %v1260, 0.6931472
    %v1262 = vmul.f32 %v1255, %v345
    %v1263 = vmul.f32 %v1257, %v345
    %v1264 = vmul.f32 %v1259, %v345
    %v1265 = vmul.f32 %v1261, %v345
    %v1270 = vrot.slane %v1262, 7
    %v1271 = vrot.slane %v1263, 7
    %v1272 = vrot.slane %v1264, 7
    %v1273 = vrot.slane %v1265, 7
    %1274 = vrot.lane.b32.xlu0 %v1270, 121
    %v1275 = vpop.permute.xlu0 %1274
    %1276 = vrot.lane.b32.xlu0 %v1271, 121
    %v1277 = vpop.permute.xlu0 %1276
    %1278 = vrot.lane.b32.xlu0 %v1272, 121
    %v1279 = vpop.permute.xlu0 %1278
    %1280 = vrot.lane.b32.xlu0 %v1273, 121
    %v1281 = vpop.permute.xlu0 %1280
    %v1286 = vadd.f32 %v1250, %v1275
    %v1287 = vadd.f32 %v1251, %v1277
    %v1288 = vadd.f32 %v1252, %v1279
    %v1289 = vadd.f32 %v1253, %v1281
    %1290 = vst [vmem:[#allocation2] sm:$0xff] 0.0
    %1291 = vst.msk [vmem:[#allocation2] sm:$0xff] %vm198, %v210
    %1293 = vrot.lane.b32.xlu0 %v212, 8
    %v1294 = vpop.permute.xlu0 %1293
    %vm1296 = vcmask 130112
    %1297 = vst.msk [vmem:[#allocation2] sm:$0xff] %vm1296, %v1294
    %1299 = vrot.lane.b32.xlu0 %v214, 16
    %v1300 = vpop.permute.xlu0 %1299
    %vm1302 = vcmask 195712
    %1303 = vst.msk [vmem:[#allocation2] sm:$0xff] %vm1302, %v1300
    %1305 = vrot.lane.b32.xlu0 %v216, 24
    %v1306 = vpop.permute.xlu0 %1305
    %vm1308 = vcmask 261312
    %1309 = vst.msk [vmem:[#allocation2] sm:$0xff] %vm1308, %v1306
    %1311 = vrot.lane.b32.xlu0 %v60, 32
    %v1312 = vpop.permute.xlu0 %1311
    %vm1314 = vcmask 320768
    %1315 = vst.msk [vmem:[#allocation2] sm:$0x3] %vm1314, %v1312
    %1317 = vrot.lane.b32.xlu0 %v62, 40
    %v1318 = vpop.permute.xlu0 %1317
    %vm1320 = vcmask 386368
    %1321 = vst.msk [vmem:[#allocation2] sm:$0x3] %vm1320, %v1318
    %vm1322 = vcmp.eq.s32.totalorder %v191, 0
    %1324 = vset.pattern.permute.xlu0 0
    %1325 = vperm.xlu0 %1324, %v1286
    %v1326 = vpop.permute.xlu0 %1325
    %v1328 = vsel %vm1322, %v1326, 0.0
    %v1329 = vadd.f32 %v1328, 0.0
    %vm1330 = vcmp.eq.s32.totalorder %v191, 1
    %1332 = vset.pattern.permute.xlu0 0
    %1333 = vperm.xlu0 %1332, %v1287
    %v1334 = vpop.permute.xlu0 %1333
    %v1336 = vsel %vm1330, %v1334, 0.0
    %v1337 = vadd.f32 %v1329, %v1336
    %vm1338 = vcmp.eq.s32.totalorder %v191, 2
    %1340 = vset.pattern.permute.xlu0 0
    %1341 = vperm.xlu0 %1340, %v1288
    %v1342 = vpop.permute.xlu0 %1341
    %v1344 = vsel %vm1338, %v1342, 0.0
    %v1345 = vadd.f32 %v1337, %v1344
    %vm1346 = vcmp.eq.s32.totalorder %v191, 3
    %1348 = vset.pattern.permute.xlu0 0
    %1349 = vperm.xlu0 %1348, %v1289
    %v1350 = vpop.permute.xlu0 %1349
    %v1352 = vsel %vm1346, %v1350, 0.0
    %v1353 = vadd.f32 %v1345, %v1352
    %1355 = vrot.lane.b32.xlu0 %v1353, 48
    %v1356 = vpop.permute.xlu0 %1355
    %vm1358 = vcmask 418176
    %1359 = vst.msk [vmem:[#allocation2] sm:$0x1] %vm1358, %v1356
    // Predicated region
    $region18: #{tpu_custom_call.1} parent=1 // pred_check
      _
    $region19: #{tpu_custom_call.1} parent=1 // pred_check_branch
      %1361 = sbr.rel (0) target = $region21
    $region20: #{tpu_custom_call.1} parent=1 // pred_region
      %1363 = vsyncadd [#allocation3], 0
      %s1365 = sshll.u32 [#allocation2], 4
      %s1366 = int_to_ptr.vmem [resolvable:$true] %s1365
      %s1367 = sshll.u32 %s4, 4
      %s1368 = int_to_ptr.hbm [resolvable:$true] %s1367
      %1370 = dma.vmem_to_hbm [thread:$0]  %s1366, 128, %s1368, [#allocation3]
    $region21: #{tpu_custom_call.1} parent=1 // pred_fallthru
      _
    // Predicated region
    $region22: #{tpu_custom_call.1} parent=1 // pred_check
      _
    $region23: #{tpu_custom_call.1} parent=1 // pred_check_branch
      %1372 = sbr.rel (0) target = $region25
    $region24: #{tpu_custom_call.1} parent=1 // pred_region
      %1374 = dma.done [#allocation3], 128
    $region25: #{tpu_custom_call.1} parent=1 // pred_fallthru
      _
    %1375 = vsyncpa [#allocation3], 1

</llo_original>
